<compile_context>
chip_gen: v7x
topology: tpu7x:2x2x1
jax: 0.10.0
libtpu: 0.0.40
codegen_flags: <defaults>
</compile_context>

<pallas_src>
import jax
import jax.numpy as jnp
import numpy as np
from jax.experimental import pallas as pl
from jax.experimental.pallas import tpu as pltpu

M_EMA = 0.999
T_MOCO = 0.07
EPS = 1e-12
EPS2 = EPS * EPS


def _round_up(x, m):
    return ((x + m - 1) // m) * m


# --------------- kernel 1: encoder paths + momentum EMA update ---------------
def encoder_kernel(
    # inputs
    xq_ref, xk_ref,
    wfs_ref, bfs_ref, wcs_ref, bcs_ref,          # src_model params (netF, netC)
    wfm_ref, bfm_ref, wcm_ref, bcm_ref,          # momentum_model params
    # outputs
    feats_q_ref, logits_q_ref, k_ref, q_bf16_ref, l_pos_ref,
    wfm_new_ref, bfm_new_ref, wcm_new_ref, bcm_new_ref,
    # scratch
    accq_ref, acck_ref,
):
    d = pl.program_id(0)

    @pl.when(d == 0)
    def _init():
        accq_ref[...] = jnp.zeros_like(accq_ref)
        acck_ref[...] = jnp.zeros_like(acck_ref)

    # EMA update of the momentum netF weight, tile-by-tile over D_in (f32).
    wfm_tile = wfm_ref[...] * M_EMA + wfs_ref[...] * (1.0 - M_EMA)
    wfm_new_ref[...] = wfm_tile

    # netF matmuls: bf16 operands on the MXU, f32 accumulation in VMEM scratch.
    accq_ref[...] += jnp.dot(
        xq_ref[...], wfs_ref[...].astype(jnp.bfloat16),
        preferred_element_type=jnp.float32)
    acck_ref[...] += jnp.dot(
        xk_ref[...], wfm_tile.astype(jnp.bfloat16),
        preferred_element_type=jnp.float32)

    @pl.when(d == pl.num_programs(0) - 1)
    def _finalize():
        # EMA of the small momentum params (netF bias, netC weight/bias).
        bfm_new = bfm_ref[...] * M_EMA + bfs_ref[...] * (1.0 - M_EMA)
        wcm_new = wcm_ref[...] * M_EMA + wcs_ref[...] * (1.0 - M_EMA)
        bcm_new = bcm_ref[...] * M_EMA + bcs_ref[...] * (1.0 - M_EMA)
        bfm_new_ref[...] = bfm_new
        wcm_new_ref[...] = wcm_new
        bcm_new_ref[...] = bcm_new

        feats_q = accq_ref[...] + bfs_ref[...]
        feats_k = acck_ref[...] + bfm_new
        feats_q_ref[...] = feats_q

        # netC head is tiny -> keep it in f32 for accuracy.
        logits_q_ref[...] = (
            jnp.dot(feats_q, wcs_ref[...], preferred_element_type=jnp.float32)
            + bcs_ref[...])

        # L2 normalization with rsqrt (EUP slot; avoids the f32 divide).
        inv_q = jax.lax.rsqrt(
            jnp.maximum(jnp.sum(feats_q * feats_q, axis=1, keepdims=True), EPS2))
        q = feats_q * inv_q
        inv_k = jax.lax.rsqrt(
            jnp.maximum(jnp.sum(feats_k * feats_k, axis=1, keepdims=True), EPS2))
        k = feats_k * inv_k

        k_ref[...] = k
        q_bf16_ref[...] = q.astype(jnp.bfloat16)
        # l_pos already scaled by 1/T_moco.
        l_pos_ref[...] = jnp.sum(q * k, axis=1, keepdims=True) * (1.0 / T_MOCO)


# --------------- kernel 2: instance logits vs. memory queue ------------------
def queue_logits_kernel(q_ref, queue_ref, lneg_ref):
    # l_neg tile = (q @ queue_tile) / T ; bf16 MXU matmul, f32 result.
    lneg_ref[...] = jnp.dot(
        q_ref[...], queue_ref[...],
        preferred_element_type=jnp.float32) * (1.0 / T_MOCO)


# -------------------------------- wrapper ------------------------------------
@jax.jit
def adamoco_forward(xq, xk, wf_s, bf_s, wc_s, bc_s, wf_m, bf_m, wc_m, bc_m, queue):
    N, D = xq.shape
    F = wf_s.shape[1]
    C = wc_s.shape[1]
    K = queue.shape[1]

    # Lane/sublane-aligned padded shapes.
    N_pad = _round_up(N, 8)
    F_pad = _round_up(F, 128)
    C_pad = _round_up(C, 128)
    K_pad = _round_up(K, 128)
    TD = 512                         # D_in reduction tile
    D_pad = _round_up(D, TD)

    def pad2(x, r, c, dtype=None):
        y = jnp.pad(x, ((0, r - x.shape[0]), (0, c - x.shape[1])))
        return y.astype(dtype) if dtype is not None else y

    # bf16 for pure-matmul operands; f32 for params that feed the EMA update.
    xq_p = pad2(xq, N_pad, D_pad, jnp.bfloat16)
    xk_p = pad2(xk, N_pad, D_pad, jnp.bfloat16)
    wfs_p = pad2(wf_s, D_pad, F_pad)
    bfs_p = pad2(bf_s, 1, F_pad)
    wcs_p = pad2(wc_s, F_pad, C_pad)
    bcs_p = pad2(bc_s, 1, C_pad)
    wfm_p = pad2(wf_m, D_pad, F_pad)
    bfm_p = pad2(bf_m, 1, F_pad)
    wcm_p = pad2(wc_m, F_pad, C_pad)
    bcm_p = pad2(bc_m, 1, C_pad)
    queue_p = pad2(queue, F_pad, K_pad, jnp.bfloat16)

    # ---- kernel 1: encoders + EMA, tiled over D_in ----
    enc_out_shapes = (
        jax.ShapeDtypeStruct((N_pad, F_pad), jnp.float32),   # feats_q
        jax.ShapeDtypeStruct((N_pad, C_pad), jnp.float32),   # logits_q
        jax.ShapeDtypeStruct((N_pad, F_pad), jnp.float32),   # k
        jax.ShapeDtypeStruct((N_pad, F_pad), jnp.bfloat16),  # q (for queue matmul)
        jax.ShapeDtypeStruct((N_pad, 1), jnp.float32),       # l_pos / T
        jax.ShapeDtypeStruct((D_pad, F_pad), jnp.float32),   # momentum netF.W (new)
        jax.ShapeDtypeStruct((1, F_pad), jnp.float32),       # momentum netF.b (new)
        jax.ShapeDtypeStruct((F_pad, C_pad), jnp.float32),   # momentum netC.W (new)
        jax.ShapeDtypeStruct((1, C_pad), jnp.float32),       # momentum netC.b (new)
    )
    enc_in_specs = [
        pl.BlockSpec((N_pad, TD), lambda d: (0, d)),      # xq
        pl.BlockSpec((N_pad, TD), lambda d: (0, d)),      # xk
        pl.BlockSpec((TD, F_pad), lambda d: (d, 0)),      # wf_s
        pl.BlockSpec((1, F_pad), lambda d: (0, 0)),       # bf_s
        pl.BlockSpec((F_pad, C_pad), lambda d: (0, 0)),   # wc_s
        pl.BlockSpec((1, C_pad), lambda d: (0, 0)),       # bc_s
        pl.BlockSpec((TD, F_pad), lambda d: (d, 0)),      # wf_m
        pl.BlockSpec((1, F_pad), lambda d: (0, 0)),       # bf_m
        pl.BlockSpec((F_pad, C_pad), lambda d: (0, 0)),   # wc_m
        pl.BlockSpec((1, C_pad), lambda d: (0, 0)),       # bc_m
    ]
    enc_out_specs = (
        pl.BlockSpec((N_pad, F_pad), lambda d: (0, 0)),   # feats_q
        pl.BlockSpec((N_pad, C_pad), lambda d: (0, 0)),   # logits_q
        pl.BlockSpec((N_pad, F_pad), lambda d: (0, 0)),   # k
        pl.BlockSpec((N_pad, F_pad), lambda d: (0, 0)),   # q bf16
        pl.BlockSpec((N_pad, 1), lambda d: (0, 0)),       # l_pos
        pl.BlockSpec((TD, F_pad), lambda d: (d, 0)),      # wfm_new (per-D tile)
        pl.BlockSpec((1, F_pad), lambda d: (0, 0)),       # bfm_new
        pl.BlockSpec((F_pad, C_pad), lambda d: (0, 0)),   # wcm_new
        pl.BlockSpec((1, C_pad), lambda d: (0, 0)),       # bcm_new
    )

    (feats_q_p, logits_q_p, k_p, q_bf16_p, l_pos_p,
     wfm_new_p, bfm_new_p, wcm_new_p, bcm_new_p) = pl.pallas_call(
        encoder_kernel,
        out_shape=enc_out_shapes,
        grid_spec=pltpu.PrefetchScalarGridSpec(
            num_scalar_prefetch=0,
            grid=(D_pad // TD,),
            in_specs=enc_in_specs,
            out_specs=enc_out_specs,
            scratch_shapes=[pltpu.VMEM((N_pad, F_pad), jnp.float32),
                            pltpu.VMEM((N_pad, F_pad), jnp.float32)],
        ),
        # Momentum params are updated in place (wf_m, bf_m, wc_m, bc_m).
        input_output_aliases={6: 5, 7: 6, 8: 7, 9: 8},
        compiler_params=pltpu.CompilerParams(
            dimension_semantics=("arbitrary",),          # D_in is a reduction axis
            vmem_limit_bytes=48 * 1024 * 1024,           # headroom for v7x 64 MiB
        ),
    )(xq_p, xk_p, wfs_p, bfs_p, wcs_p, bcs_p, wfm_p, bfm_p, wcm_p, bcm_p)

    # ---- kernel 2: l_neg = q @ queue, tiled + parallel over K ----
    TK = min(K_pad, 2048)
    while K_pad % TK:
        TK -= 128

    l_neg_p = pl.pallas_call(
        queue_logits_kernel,
        out_shape=jax.ShapeDtypeStruct((N_pad, K_pad), jnp.float32),
        grid_spec=pltpu.PrefetchScalarGridSpec(
            num_scalar_prefetch=0,
            grid=(K_pad // TK,),
            in_specs=[
                pl.BlockSpec((N_pad, F_pad), lambda j: (0, 0)),   # q (resident)
                pl.BlockSpec((F_pad, TK), lambda j: (0, j)),      # queue tile
            ],
            out_specs=pl.BlockSpec((N_pad, TK), lambda j: (0, j)),
        ),
        compiler_params=pltpu.CompilerParams(
            dimension_semantics=("parallel",),           # megacore-shardable on v7x
            vmem_limit_bytes=48 * 1024 * 1024,
        ),
    )(q_bf16_p, queue_p)

    # ---- strip padding, assemble logits_ins (both halves already / T) ----
    feats_q = feats_q_p[:N, :F]
    logits_q = logits_q_p[:N, :C]
    k = k_p[:N, :F]
    logits_ins = jnp.concatenate([l_pos_p[:N], l_neg_p[:N, :K]], axis=1)
    wfm_new = wfm_new_p[:D, :F]
    bfm_new = bfm_new_p[:, :F]
    wcm_new = wcm_new_p[:F, :C]
    bcm_new = bcm_new_p[:, :C]
    return feats_q, logits_q, logits_ins, k, wfm_new, bfm_new, wcm_new, bcm_new


# -------------------------- pure-JAX reference --------------------------------
def reference_forward(xq, xk, wf_s, bf_s, wc_s, bc_s, wf_m, bf_m, wc_m, bc_m, queue):
    bf16, f32 = jnp.bfloat16, jnp.float32
    feats_q = jnp.dot(xq.astype(bf16), wf_s.astype(bf16),
                      preferred_element_type=f32) + bf_s
    logits_q = jnp.dot(feats_q, wc_s, preferred_element_type=f32) + bc_s
    q = feats_q * jax.lax.rsqrt(
        jnp.maximum(jnp.sum(feats_q * feats_q, axis=1, keepdims=True), EPS2))
    wfm_new = wf_m * M_EMA + wf_s * (1.0 - M_EMA)
    bfm_new = bf_m * M_EMA + bf_s * (1.0 - M_EMA)
    wcm_new = wc_m * M_EMA + wc_s * (1.0 - M_EMA)
    bcm_new = bc_m * M_EMA + bc_s * (1.0 - M_EMA)
    feats_k = jnp.dot(xk.astype(bf16), wfm_new.astype(bf16),
                      preferred_element_type=f32) + bfm_new
    k = feats_k * jax.lax.rsqrt(
        jnp.maximum(jnp.sum(feats_k * feats_k, axis=1, keepdims=True), EPS2))
    l_pos = jnp.sum(q * k, axis=1, keepdims=True)
    l_neg = jnp.dot(q.astype(bf16), queue.astype(bf16), preferred_element_type=f32)
    logits_ins = jnp.concatenate([l_pos, l_neg], axis=1) * (1.0 / T_MOCO)
    return feats_q, logits_q, logits_ins, k, wfm_new, bfm_new, wcm_new, bcm_new


if __name__ == "__main__":
    # Small shapes consistent with the module
    N, C_in, H, W = 2, 4, 16, 16          # image batch, NCHW
    D_in = C_in * H * W                   # 1024 after flatten
    F_dim = 32                            # features_length
    num_classes = 8
    dataset_length = 128
    K = min(16384, dataset_length)        # queue size -> 128

    key = jax.random.PRNGKey(0)
    ks = jax.random.split(key, 8)

    im_q = jax.random.normal(ks[0], (N, C_in, H, W), jnp.float32)   # NCHW
    im_k = jax.random.normal(ks[1], (N, C_in, H, W), jnp.float32)   # NCHW

    # Deterministic synthetic parameters (netF: D_in->F, netC: F->num_classes)
    wf_s = jax.random.normal(ks[2], (D_in, F_dim), jnp.float32) * 0.02
    bf_s = jnp.zeros((1, F_dim), jnp.float32)
    wc_s = jax.random.normal(ks[3], (F_dim, num_classes), jnp.float32) * 0.1
    bc_s = jnp.zeros((1, num_classes), jnp.float32)
    # momentum model starts as a slightly perturbed copy (so EMA is visible)
    wf_m = wf_s + jax.random.normal(ks[4], (D_in, F_dim), jnp.float32) * 0.001
    bf_m = jnp.zeros((1, F_dim), jnp.float32)
    wc_m = wc_s + jax.random.normal(ks[5], (F_dim, num_classes), jnp.float32) * 0.001
    bc_m = jnp.zeros((1, num_classes), jnp.float32)

    # Memory queue buffer: randn(features_length, K) normalized along dim=0
    queue = jax.random.normal(ks[6], (F_dim, K), jnp.float32)
    queue = queue / jnp.maximum(jnp.linalg.norm(queue, axis=0, keepdims=True), EPS)

    # Flatten NCHW images (glue, outside the kernel)
    xq = im_q.reshape(N, D_in)
    xk = im_k.reshape(N, D_in)

    args = (xq, xk, wf_s, bf_s, wc_s, bc_s, wf_m, bf_m, wc_m, bc_m, queue)

    outs = adamoco_forward(*args)
    outs = jax.block_until_ready(outs)

    refs = reference_forward(*args)
    # bf16 MXU matmuls (f32 accumulation) -> relaxed tolerance vs. f32 math.
    for o, r in zip(outs, refs):
        np.testing.assert_allclose(np.asarray(o), np.asarray(r),
                                   rtol=1e-2, atol=1e-2)

    print("KERNEL_OK")
</pallas_src>

<mosaic_0001>
module attributes {stable_mosaic.version = 11 : i64} {
  func.func @encoder_kernel(%arg0: i32, %arg1: memref<8x512xbf16, #tpu.memory_space<vmem>>, %arg2: memref<8x512xbf16, #tpu.memory_space<vmem>>, %arg3: memref<512x128xf32, #tpu.memory_space<vmem>>, %arg4: memref<1x128xf32, #tpu.memory_space<vmem>>, %arg5: memref<128x128xf32, #tpu.memory_space<vmem>>, %arg6: memref<1x128xf32, #tpu.memory_space<vmem>>, %arg7: memref<512x128xf32, #tpu.memory_space<vmem>>, %arg8: memref<1x128xf32, #tpu.memory_space<vmem>>, %arg9: memref<128x128xf32, #tpu.memory_space<vmem>>, %arg10: memref<1x128xf32, #tpu.memory_space<vmem>>, %arg11: memref<8x128xf32, #tpu.memory_space<vmem>>, %arg12: memref<8x128xf32, #tpu.memory_space<vmem>>, %arg13: memref<8x128xf32, #tpu.memory_space<vmem>>, %arg14: memref<8x128xbf16, #tpu.memory_space<vmem>>, %arg15: memref<8x1xf32, #tpu.memory_space<vmem>>, %arg16: memref<512x128xf32, #tpu.memory_space<vmem>>, %arg17: memref<1x128xf32, #tpu.memory_space<vmem>>, %arg18: memref<128x128xf32, #tpu.memory_space<vmem>>, %arg19: memref<1x128xf32, #tpu.memory_space<vmem>>, %arg20: memref<8x128xf32, #tpu.memory_space<vmem>>, %arg21: memref<8x128xf32, #tpu.memory_space<vmem>>) attributes {dimension_semantics = [#tpu.dimension_semantics<arbitrary>], iteration_bounds = array<i64: 2>, scalar_prefetch = 0 : i64, scratch_operands = 2 : i64, tpu.core_type = #tpu.core_type<tc>, window_params = [{transform_indices = @transform_0, window_bounds = array<i64: 8, 512>}, {transform_indices = @transform_1, window_bounds = array<i64: 8, 512>}, {transform_indices = @transform_2, window_bounds = array<i64: 512, 128>}, {pipeline_mode = #tpu.pipeline_mode<synchronous>, transform_indices = @transform_3, window_bounds = array<i64: 1, 128>}, {pipeline_mode = #tpu.pipeline_mode<synchronous>, transform_indices = @transform_4, window_bounds = array<i64: 128, 128>}, {pipeline_mode = #tpu.pipeline_mode<synchronous>, transform_indices = @transform_5, window_bounds = array<i64: 1, 128>}, {transform_indices = @transform_6, window_bounds = array<i64: 512, 128>}, {pipeline_mode = #tpu.pipeline_mode<synchronous>, transform_indices = @transform_7, window_bounds = array<i64: 1, 128>}, {pipeline_mode = #tpu.pipeline_mode<synchronous>, transform_indices = @transform_8, window_bounds = array<i64: 128, 128>}, {pipeline_mode = #tpu.pipeline_mode<synchronous>, transform_indices = @transform_9, window_bounds = array<i64: 1, 128>}, {pipeline_mode = #tpu.pipeline_mode<synchronous>, transform_indices = @transform_10, window_bounds = array<i64: 8, 128>}, {pipeline_mode = #tpu.pipeline_mode<synchronous>, transform_indices = @transform_11, window_bounds = array<i64: 8, 128>}, {pipeline_mode = #tpu.pipeline_mode<synchronous>, transform_indices = @transform_12, window_bounds = array<i64: 8, 128>}, {pipeline_mode = #tpu.pipeline_mode<synchronous>, transform_indices = @transform_13, window_bounds = array<i64: 8, 128>}, {pipeline_mode = #tpu.pipeline_mode<synchronous>, transform_indices = @transform_14, window_bounds = array<i64: 8, 1>}, {transform_indices = @transform_15, window_bounds = array<i64: 512, 128>}, {pipeline_mode = #tpu.pipeline_mode<synchronous>, transform_indices = @transform_16, window_bounds = array<i64: 1, 128>}, {pipeline_mode = #tpu.pipeline_mode<synchronous>, transform_indices = @transform_17, window_bounds = array<i64: 128, 128>}, {pipeline_mode = #tpu.pipeline_mode<synchronous>, transform_indices = @transform_18, window_bounds = array<i64: 1, 128>}]} {
    %c0_i32 = arith.constant 0 : i32
    %0 = arith.cmpi eq, %arg0, %c0_i32 : i32
    %1 = arith.extui %0 : i1 to i32
    %c0_i32_0 = arith.constant 0 : i32
    %2 = arith.cmpi ne, %1, %c0_i32_0 : i32
    scf.if %2 {
      %cst_24 = arith.constant 0.000000e+00 : f32
      %27 = vector.broadcast %cst_24 : f32 to vector<8x128xf32>
      %c0_25 = arith.constant 0 : index
      %c0_26 = arith.constant 0 : index
      %28 = vector.load %arg20[%c0_25, %c0_26] : memref<8x128xf32, #tpu.memory_space<vmem>>, vector<8x128xf32>
      tpu.vector_store %arg20[%c0_25, %c0_26], %27 {strides = array<i32>} : memref<8x128xf32, #tpu.memory_space<vmem>>, vector<8x128xf32>,
      %cst_27 = arith.constant 0.000000e+00 : f32
      %29 = vector.broadcast %cst_27 : f32 to vector<8x128xf32>
      %c0_28 = arith.constant 0 : index
      %c0_29 = arith.constant 0 : index
      %30 = vector.load %arg21[%c0_28, %c0_29] : memref<8x128xf32, #tpu.memory_space<vmem>>, vector<8x128xf32>
      tpu.vector_store %arg21[%c0_28, %c0_29], %29 {strides = array<i32>} : memref<8x128xf32, #tpu.memory_space<vmem>>, vector<8x128xf32>,
    } else {
    }
    %c0 = arith.constant 0 : index
    %c0_1 = arith.constant 0 : index
    %3 = vector.load %arg7[%c0, %c0_1] : memref<512x128xf32, #tpu.memory_space<vmem>>, vector<512x128xf32>
    %cst = arith.constant 9.990000e-01 : f32
    %4 = vector.broadcast %cst : f32 to vector<512x128xf32>
    %5 = arith.mulf %3, %4 : vector<512x128xf32>
    %c0_2 = arith.constant 0 : index
    %c0_3 = arith.constant 0 : index
    %6 = vector.load %arg3[%c0_2, %c0_3] : memref<512x128xf32, #tpu.memory_space<vmem>>, vector<512x128xf32>
    %cst_4 = arith.constant 1.000000e-03 : f32
    %7 = vector.broadcast %cst_4 : f32 to vector<512x128xf32>
    %8 = arith.mulf %6, %7 : vector<512x128xf32>
    %9 = arith.addf %5, %8 : vector<512x128xf32>
    %c0_5 = arith.constant 0 : index
    %c0_6 = arith.constant 0 : index
    %10 = vector.load %arg16[%c0_5, %c0_6] : memref<512x128xf32, #tpu.memory_space<vmem>>, vector<512x128xf32>
    tpu.vector_store %arg16[%c0_5, %c0_6], %9 {strides = array<i32>} : memref<512x128xf32, #tpu.memory_space<vmem>>, vector<512x128xf32>,
    %c0_7 = arith.constant 0 : index
    %c0_8 = arith.constant 0 : index
    %11 = vector.load %arg20[%c0_7, %c0_8] : memref<8x128xf32, #tpu.memory_space<vmem>>, vector<8x128xf32>
    %c0_9 = arith.constant 0 : index
    %c0_10 = arith.constant 0 : index
    %12 = vector.load %arg1[%c0_9, %c0_10] : memref<8x512xbf16, #tpu.memory_space<vmem>>, vector<8x512xbf16>
    %c0_11 = arith.constant 0 : index
    %c0_12 = arith.constant 0 : index
    %13 = vector.load %arg3[%c0_11, %c0_12] : memref<512x128xf32, #tpu.memory_space<vmem>>, vector<512x128xf32>
    %14 = arith.truncf %13 : vector<512x128xf32> to vector<512x128xbf16>
    %cst_13 = arith.constant dense<0.000000e+00> : vector<8x128xf32>
    %15 = tpu.matmul %12, %14, %cst_13 {dimension_numbers = #tpu.dot_dimension_numbers<[1], [0], [0], [1], [0, 0, 1, 1], [], []>} : vector<8x512xbf16>, vector<512x128xbf16>, vector<8x128xf32> -> vector<8x128xf32>
    %16 = arith.addf %11, %15 : vector<8x128xf32>
    %c0_14 = arith.constant 0 : index
    %c0_15 = arith.constant 0 : index
    %17 = vector.load %arg20[%c0_14, %c0_15] : memref<8x128xf32, #tpu.memory_space<vmem>>, vector<8x128xf32>
    tpu.vector_store %arg20[%c0_14, %c0_15], %16 {strides = array<i32>} : memref<8x128xf32, #tpu.memory_space<vmem>>, vector<8x128xf32>,
    %c0_16 = arith.constant 0 : index
    %c0_17 = arith.constant 0 : index
    %18 = vector.load %arg21[%c0_16, %c0_17] : memref<8x128xf32, #tpu.memory_space<vmem>>, vector<8x128xf32>
    %c0_18 = arith.constant 0 : index
    %c0_19 = arith.constant 0 : index
    %19 = vector.load %arg2[%c0_18, %c0_19] : memref<8x512xbf16, #tpu.memory_space<vmem>>, vector<8x512xbf16>
    %20 = arith.truncf %9 : vector<512x128xf32> to vector<512x128xbf16>
    %cst_20 = arith.constant dense<0.000000e+00> : vector<8x128xf32>
    %21 = tpu.matmul %19, %20, %cst_20 {dimension_numbers = #tpu.dot_dimension_numbers<[1], [0], [0], [1], [0, 0, 1, 1], [], []>} : vector<8x512xbf16>, vector<512x128xbf16>, vector<8x128xf32> -> vector<8x128xf32>
    %22 = arith.addf %18, %21 : vector<8x128xf32>
    %c0_21 = arith.constant 0 : index
    %c0_22 = arith.constant 0 : index
    %23 = vector.load %arg21[%c0_21, %c0_22] : memref<8x128xf32, #tpu.memory_space<vmem>>, vector<8x128xf32>
    tpu.vector_store %arg21[%c0_21, %c0_22], %22 {strides = array<i32>} : memref<8x128xf32, #tpu.memory_space<vmem>>, vector<8x128xf32>,
    %c1_i32 = arith.constant 1 : i32
    %24 = arith.cmpi eq, %arg0, %c1_i32 : i32
    %25 = arith.extui %24 : i1 to i32
    %c0_i32_23 = arith.constant 0 : i32
    %26 = arith.cmpi ne, %25, %c0_i32_23 : i32
    scf.if %26 {
      %c0_24 = arith.constant 0 : index
      %c0_25 = arith.constant 0 : index
      %27 = vector.load %arg8[%c0_24, %c0_25] : memref<1x128xf32, #tpu.memory_space<vmem>>, vector<1x128xf32>
      %cst_26 = arith.constant 9.990000e-01 : f32
      %28 = vector.broadcast %cst_26 : f32 to vector<1x128xf32>
      %29 = arith.mulf %27, %28 : vector<1x128xf32>
      %c0_27 = arith.constant 0 : index
      %c0_28 = arith.constant 0 : index
      %30 = vector.load %arg4[%c0_27, %c0_28] : memref<1x128xf32, #tpu.memory_space<vmem>>, vector<1x128xf32>
      %cst_29 = arith.constant 1.000000e-03 : f32
      %31 = vector.broadcast %cst_29 : f32 to vector<1x128xf32>
      %32 = arith.mulf %30, %31 : vector<1x128xf32>
      %33 = arith.addf %29, %32 : vector<1x128xf32>
      %c0_30 = arith.constant 0 : index
      %c0_31 = arith.constant 0 : index
      %34 = vector.load %arg9[%c0_30, %c0_31] : memref<128x128xf32, #tpu.memory_space<vmem>>, vector<128x128xf32>
      %cst_32 = arith.constant 9.990000e-01 : f32
      %35 = vector.broadcast %cst_32 : f32 to vector<128x128xf32>
      %36 = arith.mulf %34, %35 : vector<128x128xf32>
      %c0_33 = arith.constant 0 : index
      %c0_34 = arith.constant 0 : index
      %37 = vector.load %arg5[%c0_33, %c0_34] : memref<128x128xf32, #tpu.memory_space<vmem>>, vector<128x128xf32>
      %cst_35 = arith.constant 1.000000e-03 : f32
      %38 = vector.broadcast %cst_35 : f32 to vector<128x128xf32>
      %39 = arith.mulf %37, %38 : vector<128x128xf32>
      %40 = arith.addf %36, %39 : vector<128x128xf32>
      %c0_36 = arith.constant 0 : index
      %c0_37 = arith.constant 0 : index
      %41 = vector.load %arg10[%c0_36, %c0_37] : memref<1x128xf32, #tpu.memory_space<vmem>>, vector<1x128xf32>
      %cst_38 = arith.constant 9.990000e-01 : f32
      %42 = vector.broadcast %cst_38 : f32 to vector<1x128xf32>
      %43 = arith.mulf %41, %42 : vector<1x128xf32>
      %c0_39 = arith.constant 0 : index
      %c0_40 = arith.constant 0 : index
      %44 = vector.load %arg6[%c0_39, %c0_40] : memref<1x128xf32, #tpu.memory_space<vmem>>, vector<1x128xf32>
      %cst_41 = arith.constant 1.000000e-03 : f32
      %45 = vector.broadcast %cst_41 : f32 to vector<1x128xf32>
      %46 = arith.mulf %44, %45 : vector<1x128xf32>
      %47 = arith.addf %43, %46 : vector<1x128xf32>
      %c0_42 = arith.constant 0 : index
      %c0_43 = arith.constant 0 : index
      %48 = vector.load %arg17[%c0_42, %c0_43] : memref<1x128xf32, #tpu.memory_space<vmem>>, vector<1x128xf32>
      tpu.vector_store %arg17[%c0_42, %c0_43], %33 {strides = array<i32>} : memref<1x128xf32, #tpu.memory_space<vmem>>, vector<1x128xf32>,
      %c0_44 = arith.constant 0 : index
      %c0_45 = arith.constant 0 : index
      %49 = vector.load %arg18[%c0_44, %c0_45] : memref<128x128xf32, #tpu.memory_space<vmem>>, vector<128x128xf32>
      tpu.vector_store %arg18[%c0_44, %c0_45], %40 {strides = array<i32>} : memref<128x128xf32, #tpu.memory_space<vmem>>, vector<128x128xf32>,
      %c0_46 = arith.constant 0 : index
      %c0_47 = arith.constant 0 : index
      %50 = vector.load %arg19[%c0_46, %c0_47] : memref<1x128xf32, #tpu.memory_space<vmem>>, vector<1x128xf32>
      tpu.vector_store %arg19[%c0_46, %c0_47], %47 {strides = array<i32>} : memref<1x128xf32, #tpu.memory_space<vmem>>, vector<1x128xf32>,
      %c0_48 = arith.constant 0 : index
      %c0_49 = arith.constant 0 : index
      %51 = vector.load %arg20[%c0_48, %c0_49] : memref<8x128xf32, #tpu.memory_space<vmem>>, vector<8x128xf32>
      %c0_50 = arith.constant 0 : index
      %c0_51 = arith.constant 0 : index
      %52 = vector.load %arg4[%c0_50, %c0_51] : memref<1x128xf32, #tpu.memory_space<vmem>>, vector<1x128xf32>
      %53 = vector.broadcast %52 : vector<1x128xf32> to vector<8x128xf32>
      %54 = arith.addf %51, %53 : vector<8x128xf32>
      %c0_52 = arith.constant 0 : index
      %c0_53 = arith.constant 0 : index
      %55 = vector.load %arg21[%c0_52, %c0_53] : memref<8x128xf32, #tpu.memory_space<vmem>>, vector<8x128xf32>
      %56 = vector.broadcast %33 : vector<1x128xf32> to vector<8x128xf32>
      %57 = arith.addf %55, %56 : vector<8x128xf32>
      %c0_54 = arith.constant 0 : index
      %c0_55 = arith.constant 0 : index
      %58 = vector.load %arg11[%c0_54, %c0_55] : memref<8x128xf32, #tpu.memory_space<vmem>>, vector<8x128xf32>
      tpu.vector_store %arg11[%c0_54, %c0_55], %54 {strides = array<i32>} : memref<8x128xf32, #tpu.memory_space<vmem>>, vector<8x128xf32>,
      %c0_56 = arith.constant 0 : index
      %c0_57 = arith.constant 0 : index
      %59 = vector.load %arg5[%c0_56, %c0_57] : memref<128x128xf32, #tpu.memory_space<vmem>>, vector<128x128xf32>
      %cst_58 = arith.constant dense<0.000000e+00> : vector<8x128xf32>
      %60 = tpu.matmul %54, %59, %cst_58 {dimension_numbers = #tpu.dot_dimension_numbers<[1], [0], [0], [1], [0, 0, 1, 1], [], []>} : vector<8x128xf32>, vector<128x128xf32>, vector<8x128xf32> -> vector<8x128xf32>
      %c0_59 = arith.constant 0 : index
      %c0_60 = arith.constant 0 : index
      %61 = vector.load %arg6[%c0_59, %c0_60] : memref<1x128xf32, #tpu.memory_space<vmem>>, vector<1x128xf32>
      %62 = vector.broadcast %61 : vector<1x128xf32> to vector<8x128xf32>
      %63 = arith.addf %60, %62 : vector<8x128xf32>
      %c0_61 = arith.constant 0 : index
      %c0_62 = arith.constant 0 : index
      %64 = vector.load %arg12[%c0_61, %c0_62] : memref<8x128xf32, #tpu.memory_space<vmem>>, vector<8x128xf32>
      tpu.vector_store %arg12[%c0_61, %c0_62], %63 {strides = array<i32>} : memref<8x128xf32, #tpu.memory_space<vmem>>, vector<8x128xf32>,
      %65 = arith.mulf %54, %54 : vector<8x128xf32>
      %cst_63 = arith.constant dense<0.000000e+00> : vector<8xf32>
      %66 = vector.multi_reduction <add>, %65, %cst_63 [1] : vector<8x128xf32> to vector<8xf32>
      %67 = vector.shape_cast %66 : vector<8xf32> to vector<8x1xf32>
      %cst_64 = arith.constant 1.000000e-24 : f32
      %68 = vector.broadcast %cst_64 : f32 to vector<8x1xf32>
      %69 = arith.maximumf %67, %68 : vector<8x1xf32>
      %70 = math.rsqrt %69 : vector<8x1xf32>
      %71 = vector.broadcast %70 : vector<8x1xf32> to vector<8x128xf32>
      %72 = arith.mulf %54, %71 : vector<8x128xf32>
      %73 = arith.mulf %57, %57 : vector<8x128xf32>
      %cst_65 = arith.constant dense<0.000000e+00> : vector<8xf32>
      %74 = vector.multi_reduction <add>, %73, %cst_65 [1] : vector<8x128xf32> to vector<8xf32>
      %75 = vector.shape_cast %74 : vector<8xf32> to vector<8x1xf32>
      %cst_66 = arith.constant 1.000000e-24 : f32
      %76 = vector.broadcast %cst_66 : f32 to vector<8x1xf32>
      %77 = arith.maximumf %75, %76 : vector<8x1xf32>
      %78 = math.rsqrt %77 : vector<8x1xf32>
      %79 = vector.broadcast %78 : vector<8x1xf32> to vector<8x128xf32>
      %80 = arith.mulf %57, %79 : vector<8x128xf32>
      %c0_67 = arith.constant 0 : index
      %c0_68 = arith.constant 0 : index
      %81 = vector.load %arg13[%c0_67, %c0_68] : memref<8x128xf32, #tpu.memory_space<vmem>>, vector<8x128xf32>
      tpu.vector_store %arg13[%c0_67, %c0_68], %80 {strides = array<i32>} : memref<8x128xf32, #tpu.memory_space<vmem>>, vector<8x128xf32>,
      %82 = arith.truncf %72 : vector<8x128xf32> to vector<8x128xbf16>
      %c0_69 = arith.constant 0 : index
      %c0_70 = arith.constant 0 : index
      %83 = vector.load %arg14[%c0_69, %c0_70] : memref<8x128xbf16, #tpu.memory_space<vmem>>, vector<8x128xbf16>
      tpu.vector_store %arg14[%c0_69, %c0_70], %82 {strides = array<i32>} : memref<8x128xbf16, #tpu.memory_space<vmem>>, vector<8x128xbf16>,
      %84 = arith.mulf %72, %80 : vector<8x128xf32>
      %cst_71 = arith.constant dense<0.000000e+00> : vector<8xf32>
      %85 = vector.multi_reduction <add>, %84, %cst_71 [1] : vector<8x128xf32> to vector<8xf32>
      %86 = vector.shape_cast %85 : vector<8xf32> to vector<8x1xf32>
      %cst_72 = arith.constant 14.2857141 : f32
      %87 = vector.broadcast %cst_72 : f32 to vector<8x1xf32>
      %88 = arith.mulf %86, %87 : vector<8x1xf32>
      %c0_73 = arith.constant 0 : index
      %c0_74 = arith.constant 0 : index
      %89 = vector.load %arg15[%c0_73, %c0_74] : memref<8x1xf32, #tpu.memory_space<vmem>>, vector<8x1xf32>
      tpu.vector_store %arg15[%c0_73, %c0_74], %88 {strides = array<i32>} : memref<8x1xf32, #tpu.memory_space<vmem>>, vector<8x1xf32>,
    } else {
    }
    return
  }
  func.func @transform_0(%arg0: i32) -> (i32, i32) {
    %c0_i32 = arith.constant 0 : i32
    %c0_i32_0 = arith.constant 0 : i32
    return %c0_i32, %arg0 : i32, i32
  }
  func.func @transform_1(%arg0: i32) -> (i32, i32) {
    %c0_i32 = arith.constant 0 : i32
    %c0_i32_0 = arith.constant 0 : i32
    return %c0_i32, %arg0 : i32, i32
  }
  func.func @transform_2(%arg0: i32) -> (i32, i32) {
    %c0_i32 = arith.constant 0 : i32
    %c0_i32_0 = arith.constant 0 : i32
    return %arg0, %c0_i32 : i32, i32
  }
  func.func @transform_3(%arg0: i32) -> (i32, i32) {
    %c0_i32 = arith.constant 0 : i32
    %c0_i32_0 = arith.constant 0 : i32
    %c0_i32_1 = arith.constant 0 : i32
    return %c0_i32, %c0_i32_0 : i32, i32
  }
  func.func @transform_4(%arg0: i32) -> (i32, i32) {
    %c0_i32 = arith.constant 0 : i32
    %c0_i32_0 = arith.constant 0 : i32
    %c0_i32_1 = arith.constant 0 : i32
    return %c0_i32, %c0_i32_0 : i32, i32
  }
  func.func @transform_5(%arg0: i32) -> (i32, i32) {
    %c0_i32 = arith.constant 0 : i32
    %c0_i32_0 = arith.constant 0 : i32
    %c0_i32_1 = arith.constant 0 : i32
    return %c0_i32, %c0_i32_0 : i32, i32
  }
  func.func @transform_6(%arg0: i32) -> (i32, i32) {
    %c0_i32 = arith.constant 0 : i32
    %c0_i32_0 = arith.constant 0 : i32
    return %arg0, %c0_i32 : i32, i32
  }
  func.func @transform_7(%arg0: i32) -> (i32, i32) {
    %c0_i32 = arith.constant 0 : i32
    %c0_i32_0 = arith.constant 0 : i32
    %c0_i32_1 = arith.constant 0 : i32
    return %c0_i32, %c0_i32_0 : i32, i32
  }
  func.func @transform_8(%arg0: i32) -> (i32, i32) {
    %c0_i32 = arith.constant 0 : i32
    %c0_i32_0 = arith.constant 0 : i32
    %c0_i32_1 = arith.constant 0 : i32
    return %c0_i32, %c0_i32_0 : i32, i32
  }
  func.func @transform_9(%arg0: i32) -> (i32, i32) {
    %c0_i32 = arith.constant 0 : i32
    %c0_i32_0 = arith.constant 0 : i32
    %c0_i32_1 = arith.constant 0 : i32
    return %c0_i32, %c0_i32_0 : i32, i32
  }
  func.func @transform_10(%arg0: i32) -> (i32, i32) {
    %c0_i32 = arith.constant 0 : i32
    %c0_i32_0 = arith.constant 0 : i32
    %c0_i32_1 = arith.constant 0 : i32
    return %c0_i32, %c0_i32_0 : i32, i32
  }
  func.func @transform_11(%arg0: i32) -> (i32, i32) {
    %c0_i32 = arith.constant 0 : i32
    %c0_i32_0 = arith.constant 0 : i32
    %c0_i32_1 = arith.constant 0 : i32
    return %c0_i32, %c0_i32_0 : i32, i32
  }
  func.func @transform_12(%arg0: i32) -> (i32, i32) {
    %c0_i32 = arith.constant 0 : i32
    %c0_i32_0 = arith.constant 0 : i32
    %c0_i32_1 = arith.constant 0 : i32
    return %c0_i32, %c0_i32_0 : i32, i32
  }
  func.func @transform_13(%arg0: i32) -> (i32, i32) {
    %c0_i32 = arith.constant 0 : i32
    %c0_i32_0 = arith.constant 0 : i32
    %c0_i32_1 = arith.constant 0 : i32
    return %c0_i32, %c0_i32_0 : i32, i32
  }
  func.func @transform_14(%arg0: i32) -> (i32, i32) {
    %c0_i32 = arith.constant 0 : i32
    %c0_i32_0 = arith.constant 0 : i32
    %c0_i32_1 = arith.constant 0 : i32
    return %c0_i32, %c0_i32_0 : i32, i32
  }
  func.func @transform_15(%arg0: i32) -> (i32, i32) {
    %c0_i32 = arith.constant 0 : i32
    %c0_i32_0 = arith.constant 0 : i32
    return %arg0, %c0_i32 : i32, i32
  }
  func.func @transform_16(%arg0: i32) -> (i32, i32) {
    %c0_i32 = arith.constant 0 : i32
    %c0_i32_0 = arith.constant 0 : i32
    %c0_i32_1 = arith.constant 0 : i32
    return %c0_i32, %c0_i32_0 : i32, i32
  }
  func.func @transform_17(%arg0: i32) -> (i32, i32) {
    %c0_i32 = arith.constant 0 : i32
    %c0_i32_0 = arith.constant 0 : i32
    %c0_i32_1 = arith.constant 0 : i32
    return %c0_i32, %c0_i32_0 : i32, i32
  }
  func.func @transform_18(%arg0: i32) -> (i32, i32) {
    %c0_i32 = arith.constant 0 : i32
    %c0_i32_0 = arith.constant 0 : i32
    %c0_i32_1 = arith.constant 0 : i32
    return %c0_i32, %c0_i32_0 : i32, i32
  }
}

module attributes {stable_mosaic.version = 11 : i64} {
  func.func @queue_logits_kernel(%arg0: i32, %arg1: memref<8x128xbf16, #tpu.memory_space<vmem>>, %arg2: memref<128x128xbf16, #tpu.memory_space<vmem>>, %arg3: memref<8x128xf32, #tpu.memory_space<vmem>>) attributes {dimension_semantics = [#tpu.dimension_semantics<parallel>], iteration_bounds = array<i64: 1>, scalar_prefetch = 0 : i64, scratch_operands = 0 : i64, tpu.core_type = #tpu.core_type<tc>, window_params = [{pipeline_mode = #tpu.pipeline_mode<synchronous>, transform_indices = @transform_0, window_bounds = array<i64: 8, 128>}, {transform_indices = @transform_1, window_bounds = array<i64: 128, 128>}, {transform_indices = @transform_2, window_bounds = array<i64: 8, 128>}]} {
    %c0 = arith.constant 0 : index
    %c0_0 = arith.constant 0 : index
    %0 = vector.load %arg1[%c0, %c0_0] : memref<8x128xbf16, #tpu.memory_space<vmem>>, vector<8x128xbf16>
    %c0_1 = arith.constant 0 : index
    %c0_2 = arith.constant 0 : index
    %1 = vector.load %arg2[%c0_1, %c0_2] : memref<128x128xbf16, #tpu.memory_space<vmem>>, vector<128x128xbf16>
    %cst = arith.constant dense<0.000000e+00> : vector<8x128xf32>
    %2 = tpu.matmul %0, %1, %cst {dimension_numbers = #tpu.dot_dimension_numbers<[1], [0], [0], [1], [0, 0, 1, 1], [], []>} : vector<8x128xbf16>, vector<128x128xbf16>, vector<8x128xf32> -> vector<8x128xf32>
    %cst_3 = arith.constant 14.2857141 : f32
    %3 = vector.broadcast %cst_3 : f32 to vector<8x128xf32>
    %4 = arith.mulf %2, %3 : vector<8x128xf32>
    %c0_4 = arith.constant 0 : index
    %c0_5 = arith.constant 0 : index
    %5 = vector.load %arg3[%c0_4, %c0_5] : memref<8x128xf32, #tpu.memory_space<vmem>>, vector<8x128xf32>
    tpu.vector_store %arg3[%c0_4, %c0_5], %4 {strides = array<i32>} : memref<8x128xf32, #tpu.memory_space<vmem>>, vector<8x128xf32>,
    return
  }
  func.func @transform_0(%arg0: i32) -> (i32, i32) {
    %c0_i32 = arith.constant 0 : i32
    %c0_i32_0 = arith.constant 0 : i32
    %c0_i32_1 = arith.constant 0 : i32
    return %c0_i32, %c0_i32_0 : i32, i32
  }
  func.func @transform_1(%arg0: i32) -> (i32, i32) {
    %c0_i32 = arith.constant 0 : i32
    %c0_i32_0 = arith.constant 0 : i32
    return %c0_i32, %arg0 : i32, i32
  }
  func.func @transform_2(%arg0: i32) -> (i32, i32) {
    %c0_i32 = arith.constant 0 : i32
    %c0_i32_0 = arith.constant 0 : i32
    return %c0_i32, %arg0 : i32, i32
  }
}

</mosaic_0001>

<llo_original>
// kernel: adamoco_forward.3
$region0: #{adamoco_forward.3}
  #allocation0 [shape = 'u32[]', space=smem, size = 0x4, offset = 0x4, fixed_abs, tag = 'smem constant byte address 0x4 - core index']
  #allocation1 [shape = 'u32[144,128]{1,0:T(1,128)}', space=vmem, size = 0x12000, scoped, tag = 'internal scratch']
  %s0 = inlined_call_operand.vmem [shape: bf16[8,128], index: 0, kind: input, shape index: {}]
  %s1 = inlined_call_operand.vmem [shape: bf16[128,128], index: 1, kind: input, shape index: {}]
  %s2 = inlined_call_operand.vmem [shape: f32[8,128], index: 2, kind: output, shape index: {}]
  %s3 = sld [smem:[#allocation0]]
  $region18: #{adamoco_forward.3} parent=0
    _
  %s5 = ssub.s32 1, %s3
  %s6 = scalar_select 0, %s5, %s3
  // Predicated region
  $region2: #{adamoco_forward.3} parent=0 // pred_check
    _
  $region3: #{adamoco_forward.3} parent=0 // pred_check_branch
    %8 = sbr.rel (0) target = $region5
  $region4: #{adamoco_forward.3} parent=0 // pred_region
    _
  $region5: #{adamoco_forward.3} parent=0 // pred_fallthru
    _
  // Predicated region
  $region6: #{adamoco_forward.3} parent=0 // pred_check
    _
  $region7: #{adamoco_forward.3} parent=0 // pred_check_branch
    %10 = sbr.rel (0) target = $region9
  $region8: #{adamoco_forward.3} parent=0 // pred_region
    _
  $region9: #{adamoco_forward.3} parent=0 // pred_fallthru
    _
  %v12 = vld [vmem:[%s0] sm:$0xf]
  %v13 = vld [vmem:[%s1] sm:$0xf]
  %v14 = vld [vmem:[%s1 + $0x4] sm:$0xf]
  %v15 = vld [vmem:[%s1 + $0x8] sm:$0xf]
  %v16 = vld [vmem:[%s1 + $0xc] sm:$0xf]
  %v17 = vld [vmem:[%s1 + $0x10] sm:$0xf]
  %v18 = vld [vmem:[%s1 + $0x14] sm:$0xf]
  %v19 = vld [vmem:[%s1 + $0x18] sm:$0xf]
  %v20 = vld [vmem:[%s1 + $0x1c] sm:$0xf]
  %v21 = vld [vmem:[%s1 + $0x20] sm:$0xf]
  %v22 = vld [vmem:[%s1 + $0x24] sm:$0xf]
  %v23 = vld [vmem:[%s1 + $0x28] sm:$0xf]
  %v24 = vld [vmem:[%s1 + $0x2c] sm:$0xf]
  %v25 = vld [vmem:[%s1 + $0x30] sm:$0xf]
  %v26 = vld [vmem:[%s1 + $0x34] sm:$0xf]
  %v27 = vld [vmem:[%s1 + $0x38] sm:$0xf]
  %v28 = vld [vmem:[%s1 + $0x3c] sm:$0xf]
  %v45 = vunpack.c.l.b16 %v13
  %v46 = vunpack.c.l.b16 %v14
  %v47 = vunpack.c.l.b16 %v15
  %v48 = vunpack.c.l.b16 %v16
  %v49 = vunpack.c.l.b16 %v17
  %v50 = vunpack.c.l.b16 %v18
  %v51 = vunpack.c.l.b16 %v19
  %v52 = vunpack.c.l.b16 %v20
  %v53 = vunpack.c.l.b16 %v21
  %v54 = vunpack.c.l.b16 %v22
  %v55 = vunpack.c.l.b16 %v23
  %v56 = vunpack.c.l.b16 %v24
  %v57 = vunpack.c.l.b16 %v25
  %v58 = vunpack.c.l.b16 %v26
  %v59 = vunpack.c.l.b16 %v27
  %v60 = vunpack.c.l.b16 %v28
  %v61 = vpack.c.b16 %v46, %v45
  %v62 = vpack.c.b16 %v48, %v47
  %v63 = vpack.c.b16 %v50, %v49
  %v64 = vpack.c.b16 %v52, %v51
  %v65 = vpack.c.b16 %v54, %v53
  %v66 = vpack.c.b16 %v56, %v55
  %v67 = vpack.c.b16 %v58, %v57
  %v68 = vpack.c.b16 %v60, %v59
  %77 = vmatprep.subr.bf16.mxu0 0
  %78 = vmatpush1.bf16.msra.mxu0 %v61
  %79 = vmatprep.subr.bf16.mxu0 0
  %80 = vmatpush1.bf16.msra.mxu0 %v62
  %81 = vmatprep.subr.bf16.mxu0 0
  %82 = vmatpush1.bf16.msra.mxu0 %v63
  %83 = vmatprep.subr.bf16.mxu0 0
  %84 = vmatpush1.bf16.msra.mxu0 %v64
  %85 = vmatprep.subr.bf16.mxu0 0
  %86 = vmatpush1.bf16.msra.mxu0 %v65
  %87 = vmatprep.subr.bf16.mxu0 0
  %88 = vmatpush1.bf16.msra.mxu0 %v66
  %89 = vmatprep.subr.bf16.mxu0 0
  %90 = vmatpush1.bf16.msra.mxu0 %v67
  %91 = vmatprep.subr.bf16.mxu0 0
  %92 = vmatpush1.bf16.msra.mxu0 %v68
  %93 = vmatprep.subr.bf16.mxu0 0
  %94 = vmatpush1.bf16.msra.mxu0 0
  %95 = vmatprep.subr.bf16.mxu0 0
  %96 = vmatpush1.bf16.msra.mxu0 0
  %97 = vmatprep.subr.bf16.mxu0 0
  %98 = vmatpush1.bf16.msra.mxu0 0
  %99 = vmatprep.subr.bf16.mxu0 0
  %100 = vmatpush1.bf16.msra.mxu0 0
  %101 = vmatprep.subr.bf16.mxu0 0
  %102 = vmatpush1.bf16.msra.mxu0 0
  %103 = vmatprep.subr.bf16.mxu0 0
  %104 = vmatpush1.bf16.msra.mxu0 0
  %105 = vmatprep.subr.bf16.mxu0 0
  %106 = vmatpush1.bf16.msra.mxu0 0
  %107 = vmatprep.subr.bf16.mxu0 0
  %108 = vmatpush1.bf16.msra.mxu0 0
  %109 = vmatprep.mubr.bf16.mxu0 0
  %110 = vmatmul.mubr.bf16.gmra.mrb[0].mxu0 %v12
  %v111 = vpop.f32.mrb[0].mxu0
  %v112 = vadd.f32 0.0, %v111
  %v113 = vpop.f32.mrb[0].mxu0
  %v114 = vpop.f32.mrb[0].mxu0
  %v115 = vpop.f32.mrb[0].mxu0
  %116 = vdwg.mxu0
  %v117 = vmul.f32 %v112, 14.285714
  %118 = vst [vmem:[%s2] sm:$0xff] %v117
  // Predicated region
  $region10: #{adamoco_forward.3} parent=0 // pred_check
    _
  $region11: #{adamoco_forward.3} parent=0 // pred_check_branch
    %120 = sbr.rel (0) target = $region13
  $region12: #{adamoco_forward.3} parent=0 // pred_region
    _
  $region13: #{adamoco_forward.3} parent=0 // pred_fallthru
    _
  // Predicated region
  $region14: #{adamoco_forward.3} parent=0 // pred_check
    _
  $region15: #{adamoco_forward.3} parent=0 // pred_check_branch
    %122 = sbr.rel (0) target = $region17
  $region16: #{adamoco_forward.3} parent=0 // pred_region
    _
  $region17: #{adamoco_forward.3} parent=0 // pred_fallthru
    _

// kernel: adamoco_forward.2
$region0: #{adamoco_forward.2}
  #allocation0 [shape = 'u32[]', space=smem, size = 0x4, offset = 0x4, fixed_abs, tag = 'smem constant byte address 0x4 - core index']
  #allocation1 [shape = 'u32[144,128]{1,0:T(1,128)}', space=vmem, size = 0x12000, scoped, tag = 'internal scratch']
  #allocation2 [shape = 'f32[8,128]{1,0:T(8,128)}', space=vmem, size = 0x1000, scoped, tag = 'scratch operand']
  #allocation3 [shape = 'f32[8,128]{1,0:T(8,128)}', space=vmem, size = 0x1000, scoped, tag = 'scratch operand']
  %s0 = inlined_call_operand.vmem [shape: bf16[8,1024], index: 0, kind: input, shape index: {}]
  %s1 = inlined_call_operand.vmem [shape: bf16[8,1024], index: 1, kind: input, shape index: {}]
  %s2 = inlined_call_operand.vmem [shape: f32[1024,128], index: 2, kind: input, shape index: {}]
  %s3 = inlined_call_operand.vmem [shape: f32[1,128], index: 3, kind: input, shape index: {}]
  %s4 = inlined_call_operand.vmem [shape: f32[128,128], index: 4, kind: input, shape index: {}]
  %s5 = inlined_call_operand.vmem [shape: f32[1,128], index: 5, kind: input, shape index: {}]
  %s6 = inlined_call_operand.vmem [shape: f32[1024,128], index: 6, kind: input, shape index: {}, may-alias: {6,15}]
  %s7 = inlined_call_operand.vmem [shape: f32[1,128], index: 7, kind: input, shape index: {}, may-alias: {7,16}]
  %s8 = inlined_call_operand.vmem [shape: f32[128,128], index: 8, kind: input, shape index: {}, may-alias: {8,17}]
  %s9 = inlined_call_operand.vmem [shape: f32[1,128], index: 9, kind: input, shape index: {}, may-alias: {9,18}]
  %s10 = inlined_call_operand.vmem [shape: f32[8,128], index: 10, kind: output, shape index: {0}]
  %s11 = inlined_call_operand.vmem [shape: f32[8,128], index: 11, kind: output, shape index: {1}]
  %s12 = inlined_call_operand.vmem [shape: f32[8,128], index: 12, kind: output, shape index: {2}]
  %s13 = inlined_call_operand.vmem [shape: bf16[8,128], index: 13, kind: output, shape index: {3}]
  %s14 = inlined_call_operand.vmem [shape: f32[8,1], index: 14, kind: output, shape index: {4}]
  %s15 = inlined_call_operand.vmem [shape: f32[1024,128], index: 15, kind: output, shape index: {5}, may-alias: {6,15}]
  %s16 = inlined_call_operand.vmem [shape: f32[1,128], index: 16, kind: output, shape index: {6}, may-alias: {7,16}]
  %s17 = inlined_call_operand.vmem [shape: f32[128,128], index: 17, kind: output, shape index: {7}, may-alias: {8,17}]
  %s18 = inlined_call_operand.vmem [shape: f32[1,128], index: 18, kind: output, shape index: {8}, may-alias: {9,18}]
  %19 = xla_tuple %s10, %s11, %s12, %s13, %s14, %s15, %s16, %s17, %s18
  %s20 = sld [smem:[#allocation0]]
  $region145: #{adamoco_forward.2} parent=0
    _
  %s22 = ssub.s32 1, %s20
  %s23 = scalar_select 0, %s22, %s20
  loop: start=0, step=1, limit=4
  $region2: #{adamoco_forward.2} parent=0 // loop_pre_header
    _
  $region3: #{adamoco_forward.2} parent=0 // loop_header
    %s25 = sphi 0, %s29
    %p26 = scmp.ge.s32.totalorder %s25, 4
    %s35 = sphi 0, %s37
    %s38 = sphi 0, %s35
    %s39 = sphi 0, %s38
    %s55 = sphi 0, %s39
    %s61 = sphi 0, %s63
    %s64 = sphi 0, %s61
    %s65 = sphi 0, %s64
    %s81 = sphi 0, %s65
    %s87 = sphi 0, %s89
    %s90 = sphi 0, %s87
    %s91 = sphi 0, %s90
    %s107 = sphi 0, %s91
    %s111 = sphi 0, %s111
    %s113 = sphi 0, %s111
    %s114 = sphi 0, %s113
    %s128 = sphi 0, %s114
    %s132 = sphi 0, %s132
    %s134 = sphi 0, %s132
    %s135 = sphi 0, %s134
    %s149 = sphi 0, %s135
    %s153 = sphi 0, %s153
    %s155 = sphi 0, %s153
    %s156 = sphi 0, %s155
    %s170 = sphi 0, %s156
    %s176 = sphi 0, %s178
    %s179 = sphi 0, %s176
    %s180 = sphi 0, %s179
    %s196 = sphi 0, %s180
    %s200 = sphi 0, %s200
    %s202 = sphi 0, %s200
    %s203 = sphi 0, %s202
    %s217 = sphi 0, %s203
    %s221 = sphi 0, %s221
    %s223 = sphi 0, %s221
    %s224 = sphi 0, %s223
    %s238 = sphi 0, %s224
    %s242 = sphi 0, %s242
    %s244 = sphi 0, %s242
    %s245 = sphi 0, %s244
    %s259 = sphi 0, %s245
    %s263 = sphi 0, %s263
    %s265 = sphi 0, %s263
    %s266 = sphi 0, %s265
    %s280 = sphi 0, %s266
    %s284 = sphi 0, %s284
    %s286 = sphi 0, %s284
    %s287 = sphi 0, %s286
    %s301 = sphi 0, %s287
    %s305 = sphi 0, %s305
    %s307 = sphi 0, %s305
    %s308 = sphi 0, %s307
    %s322 = sphi 0, %s308
    %s326 = sphi 0, %s326
    %s328 = sphi 0, %s326
    %s329 = sphi 0, %s328
    %s343 = sphi 0, %s329
    %s347 = sphi 0, %s347
    %s349 = sphi 0, %s347
    %s350 = sphi 0, %s349
    %s364 = sphi 0, %s350
    %s370 = sphi 0, %s372
    %s373 = sphi 0, %s370
    %s374 = sphi 0, %s373
    %s390 = sphi 0, %s374
    %s394 = sphi 0, %s394
    %s396 = sphi 0, %s394
    %s397 = sphi 0, %s396
    %s411 = sphi 0, %s397
    %s415 = sphi 0, %s415
    %s417 = sphi 0, %s415
    %s418 = sphi 0, %s417
    %s432 = sphi 0, %s418
    %s436 = sphi 0, %s436
    %s438 = sphi 0, %s436
    %s439 = sphi 0, %s438
    %s453 = sphi 0, %s439
  $region4: #{adamoco_forward.2} parent=0 // loop_header_branch
    %28 = sbr.rel (%p26) target = $region8
  $region5: #{adamoco_forward.2} parent=0 // loop_body
    %s30 = ssub.s32 %s25, 1
    %s31 = ssub.s32 %s25, 2
    %s32 = sadd.s32 %s25, 1
    %s33 = ssub.s32 %s25, %s32
    %p34 = scmp.eq.s32.totalorder %s33, 0
    %s36 = sadd.s32 %s35, 1
    %s37 = scalar_select %p34, %s35, %s36
    %p40 = pneg %p34
    %p41 = scmp.eq.s32.totalorder %s25, 1
    %p42 = por %p40, %p41
    %p43 = scmp.ne.s32.totalorder %s35, %s38
    %p44 = scmp.eq.s32.totalorder %s25, 0
    %p45 = por %p43, %p44
    %p46 = scmp.ne.s32.totalorder %s35, %s38
    %p47 = scmp.eq.s32.totalorder %s30, 1
    %p48 = por %p46, %p47
    %p49 = scmp.ne.s32.totalorder %s38, %s39
    %p50 = scmp.eq.s32.totalorder %s30, 0
    %p51 = por %p49, %p50
    %p52 = scmp.ne.s32.totalorder %s38, %s39
    %p53 = scmp.eq.s32.totalorder %s31, 1
    %p54 = por %p52, %p53
    %p56 = scmp.ne.s32.totalorder %s39, %s55
    %p57 = scmp.eq.s32.totalorder %s31, 0
    %p58 = por %p56, %p57
    %s59 = ssub.s32 %s25, %s32
    %p60 = scmp.eq.s32.totalorder %s59, 0
    %s62 = sadd.s32 %s61, 1
    %s63 = scalar_select %p60, %s61, %s62
    %p66 = pneg %p60
    %p67 = scmp.eq.s32.totalorder %s25, 1
    %p68 = por %p66, %p67
    %p69 = scmp.ne.s32.totalorder %s61, %s64
    %p70 = scmp.eq.s32.totalorder %s25, 0
    %p71 = por %p69, %p70
    %p72 = scmp.ne.s32.totalorder %s61, %s64
    %p73 = scmp.eq.s32.totalorder %s30, 1
    %p74 = por %p72, %p73
    %p75 = scmp.ne.s32.totalorder %s64, %s65
    %p76 = scmp.eq.s32.totalorder %s30, 0
    %p77 = por %p75, %p76
    %p78 = scmp.ne.s32.totalorder %s64, %s65
    %p79 = scmp.eq.s32.totalorder %s31, 1
    %p80 = por %p78, %p79
    %p82 = scmp.ne.s32.totalorder %s65, %s81
    %p83 = scmp.eq.s32.totalorder %s31, 0
    %p84 = por %p82, %p83
    %s85 = ssub.s32 %s25, %s32
    %p86 = scmp.eq.s32.totalorder %s85, 0
    %s88 = sadd.s32 %s87, 1
    %s89 = scalar_select %p86, %s87, %s88
    %p92 = pneg %p86
    %p93 = scmp.eq.s32.totalorder %s25, 1
    %p94 = por %p92, %p93
    %p95 = scmp.ne.s32.totalorder %s87, %s90
    %p96 = scmp.eq.s32.totalorder %s25, 0
    %p97 = por %p95, %p96
    %p98 = scmp.ne.s32.totalorder %s87, %s90
    %p99 = scmp.eq.s32.totalorder %s30, 1
    %p100 = por %p98, %p99
    %p101 = scmp.ne.s32.totalorder %s90, %s91
    %p102 = scmp.eq.s32.totalorder %s30, 0
    %p103 = por %p101, %p102
    %p104 = scmp.ne.s32.totalorder %s90, %s91
    %p105 = scmp.eq.s32.totalorder %s31, 1
    %p106 = por %p104, %p105
    %p108 = scmp.ne.s32.totalorder %s91, %s107
    %p109 = scmp.eq.s32.totalorder %s31, 0
    %p110 = por %p108, %p109
    %s112 = sadd.s32 %s111, 1
    %p115 = scmp.eq.s32.totalorder %s25, 1
    %p116 = scmp.ne.s32.totalorder %s111, %s113
    %p117 = scmp.eq.s32.totalorder %s25, 0
    %p118 = por %p116, %p117
    %p119 = scmp.ne.s32.totalorder %s111, %s113
    %p120 = scmp.eq.s32.totalorder %s30, 1
    %p121 = por %p119, %p120
    %p122 = scmp.ne.s32.totalorder %s113, %s114
    %p123 = scmp.eq.s32.totalorder %s30, 0
    %p124 = por %p122, %p123
    %p125 = scmp.ne.s32.totalorder %s113, %s114
    %p126 = scmp.eq.s32.totalorder %s31, 1
    %p127 = por %p125, %p126
    %p129 = scmp.ne.s32.totalorder %s114, %s128
    %p130 = scmp.eq.s32.totalorder %s31, 0
    %p131 = por %p129, %p130
    %s133 = sadd.s32 %s132, 1
    %p136 = scmp.eq.s32.totalorder %s25, 1
    %p137 = scmp.ne.s32.totalorder %s132, %s134
    %p138 = scmp.eq.s32.totalorder %s25, 0
    %p139 = por %p137, %p138
    %p140 = scmp.ne.s32.totalorder %s132, %s134
    %p141 = scmp.eq.s32.totalorder %s30, 1
    %p142 = por %p140, %p141
    %p143 = scmp.ne.s32.totalorder %s134, %s135
    %p144 = scmp.eq.s32.totalorder %s30, 0
    %p145 = por %p143, %p144
    %p146 = scmp.ne.s32.totalorder %s134, %s135
    %p147 = scmp.eq.s32.totalorder %s31, 1
    %p148 = por %p146, %p147
    %p150 = scmp.ne.s32.totalorder %s135, %s149
    %p151 = scmp.eq.s32.totalorder %s31, 0
    %p152 = por %p150, %p151
    %s154 = sadd.s32 %s153, 1
    %p157 = scmp.eq.s32.totalorder %s25, 1
    %p158 = scmp.ne.s32.totalorder %s153, %s155
    %p159 = scmp.eq.s32.totalorder %s25, 0
    %p160 = por %p158, %p159
    %p161 = scmp.ne.s32.totalorder %s153, %s155
    %p162 = scmp.eq.s32.totalorder %s30, 1
    %p163 = por %p161, %p162
    %p164 = scmp.ne.s32.totalorder %s155, %s156
    %p165 = scmp.eq.s32.totalorder %s30, 0
    %p166 = por %p164, %p165
    %p167 = scmp.ne.s32.totalorder %s155, %s156
    %p168 = scmp.eq.s32.totalorder %s31, 1
    %p169 = por %p167, %p168
    %p171 = scmp.ne.s32.totalorder %s156, %s170
    %p172 = scmp.eq.s32.totalorder %s31, 0
    %p173 = por %p171, %p172
    %s174 = ssub.s32 %s25, %s32
    %p175 = scmp.eq.s32.totalorder %s174, 0
    %s177 = sadd.s32 %s176, 1
    %s178 = scalar_select %p175, %s176, %s177
    %p181 = pneg %p175
    %p182 = scmp.eq.s32.totalorder %s25, 1
    %p183 = por %p181, %p182
    %p184 = scmp.ne.s32.totalorder %s176, %s179
    %p185 = scmp.eq.s32.totalorder %s25, 0
    %p186 = por %p184, %p185
    %p187 = scmp.ne.s32.totalorder %s176, %s179
    %p188 = scmp.eq.s32.totalorder %s30, 1
    %p189 = por %p187, %p188
    %p190 = scmp.ne.s32.totalorder %s179, %s180
    %p191 = scmp.eq.s32.totalorder %s30, 0
    %p192 = por %p190, %p191
    %p193 = scmp.ne.s32.totalorder %s179, %s180
    %p194 = scmp.eq.s32.totalorder %s31, 1
    %p195 = por %p193, %p194
    %p197 = scmp.ne.s32.totalorder %s180, %s196
    %p198 = scmp.eq.s32.totalorder %s31, 0
    %p199 = por %p197, %p198
    %s201 = sadd.s32 %s200, 1
    %p204 = scmp.eq.s32.totalorder %s25, 1
    %p205 = scmp.ne.s32.totalorder %s200, %s202
    %p206 = scmp.eq.s32.totalorder %s25, 0
    %p207 = por %p205, %p206
    %p208 = scmp.ne.s32.totalorder %s200, %s202
    %p209 = scmp.eq.s32.totalorder %s30, 1
    %p210 = por %p208, %p209
    %p211 = scmp.ne.s32.totalorder %s202, %s203
    %p212 = scmp.eq.s32.totalorder %s30, 0
    %p213 = por %p211, %p212
    %p214 = scmp.ne.s32.totalorder %s202, %s203
    %p215 = scmp.eq.s32.totalorder %s31, 1
    %p216 = por %p214, %p215
    %p218 = scmp.ne.s32.totalorder %s203, %s217
    %p219 = scmp.eq.s32.totalorder %s31, 0
    %p220 = por %p218, %p219
    %s222 = sadd.s32 %s221, 1
    %p225 = scmp.eq.s32.totalorder %s25, 1
    %p226 = scmp.ne.s32.totalorder %s221, %s223
    %p227 = scmp.eq.s32.totalorder %s25, 0
    %p228 = por %p226, %p227
    %p229 = scmp.ne.s32.totalorder %s221, %s223
    %p230 = scmp.eq.s32.totalorder %s30, 1
    %p231 = por %p229, %p230
    %p232 = scmp.ne.s32.totalorder %s223, %s224
    %p233 = scmp.eq.s32.totalorder %s30, 0
    %p234 = por %p232, %p233
    %p235 = scmp.ne.s32.totalorder %s223, %s224
    %p236 = scmp.eq.s32.totalorder %s31, 1
    %p237 = por %p235, %p236
    %p239 = scmp.ne.s32.totalorder %s224, %s238
    %p240 = scmp.eq.s32.totalorder %s31, 0
    %p241 = por %p239, %p240
    %s243 = sadd.s32 %s242, 1
    %p246 = scmp.eq.s32.totalorder %s25, 1
    %p247 = scmp.ne.s32.totalorder %s242, %s244
    %p248 = scmp.eq.s32.totalorder %s25, 0
    %p249 = por %p247, %p248
    %p250 = scmp.ne.s32.totalorder %s242, %s244
    %p251 = scmp.eq.s32.totalorder %s30, 1
    %p252 = por %p250, %p251
    %p253 = scmp.ne.s32.totalorder %s244, %s245
    %p254 = scmp.eq.s32.totalorder %s30, 0
    %p255 = por %p253, %p254
    %p256 = scmp.ne.s32.totalorder %s244, %s245
    %p257 = scmp.eq.s32.totalorder %s31, 1
    %p258 = por %p256, %p257
    %p260 = scmp.ne.s32.totalorder %s245, %s259
    %p261 = scmp.eq.s32.totalorder %s31, 0
    %p262 = por %p260, %p261
    %s264 = sadd.s32 %s263, 1
    %p267 = scmp.eq.s32.totalorder %s25, 1
    %p268 = scmp.ne.s32.totalorder %s263, %s265
    %p269 = scmp.eq.s32.totalorder %s25, 0
    %p270 = por %p268, %p269
    %p271 = scmp.ne.s32.totalorder %s263, %s265
    %p272 = scmp.eq.s32.totalorder %s30, 1
    %p273 = por %p271, %p272
    %p274 = scmp.ne.s32.totalorder %s265, %s266
    %p275 = scmp.eq.s32.totalorder %s30, 0
    %p276 = por %p274, %p275
    %p277 = scmp.ne.s32.totalorder %s265, %s266
    %p278 = scmp.eq.s32.totalorder %s31, 1
    %p279 = por %p277, %p278
    %p281 = scmp.ne.s32.totalorder %s266, %s280
    %p282 = scmp.eq.s32.totalorder %s31, 0
    %p283 = por %p281, %p282
    %s285 = sadd.s32 %s284, 1
    %p288 = scmp.eq.s32.totalorder %s25, 1
    %p289 = scmp.ne.s32.totalorder %s284, %s286
    %p290 = scmp.eq.s32.totalorder %s25, 0
    %p291 = por %p289, %p290
    %p292 = scmp.ne.s32.totalorder %s284, %s286
    %p293 = scmp.eq.s32.totalorder %s30, 1
    %p294 = por %p292, %p293
    %p295 = scmp.ne.s32.totalorder %s286, %s287
    %p296 = scmp.eq.s32.totalorder %s30, 0
    %p297 = por %p295, %p296
    %p298 = scmp.ne.s32.totalorder %s286, %s287
    %p299 = scmp.eq.s32.totalorder %s31, 1
    %p300 = por %p298, %p299
    %p302 = scmp.ne.s32.totalorder %s287, %s301
    %p303 = scmp.eq.s32.totalorder %s31, 0
    %p304 = por %p302, %p303
    %s306 = sadd.s32 %s305, 1
    %p309 = scmp.eq.s32.totalorder %s25, 1
    %p310 = scmp.ne.s32.totalorder %s305, %s307
    %p311 = scmp.eq.s32.totalorder %s25, 0
    %p312 = por %p310, %p311
    %p313 = scmp.ne.s32.totalorder %s305, %s307
    %p314 = scmp.eq.s32.totalorder %s30, 1
    %p315 = por %p313, %p314
    %p316 = scmp.ne.s32.totalorder %s307, %s308
    %p317 = scmp.eq.s32.totalorder %s30, 0
    %p318 = por %p316, %p317
    %p319 = scmp.ne.s32.totalorder %s307, %s308
    %p320 = scmp.eq.s32.totalorder %s31, 1
    %p321 = por %p319, %p320
    %p323 = scmp.ne.s32.totalorder %s308, %s322
    %p324 = scmp.eq.s32.totalorder %s31, 0
    %p325 = por %p323, %p324
    %s327 = sadd.s32 %s326, 1
    %p330 = scmp.eq.s32.totalorder %s25, 1
    %p331 = scmp.ne.s32.totalorder %s326, %s328
    %p332 = scmp.eq.s32.totalorder %s25, 0
    %p333 = por %p331, %p332
    %p334 = scmp.ne.s32.totalorder %s326, %s328
    %p335 = scmp.eq.s32.totalorder %s30, 1
    %p336 = por %p334, %p335
    %p337 = scmp.ne.s32.totalorder %s328, %s329
    %p338 = scmp.eq.s32.totalorder %s30, 0
    %p339 = por %p337, %p338
    %p340 = scmp.ne.s32.totalorder %s328, %s329
    %p341 = scmp.eq.s32.totalorder %s31, 1
    %p342 = por %p340, %p341
    %p344 = scmp.ne.s32.totalorder %s329, %s343
    %p345 = scmp.eq.s32.totalorder %s31, 0
    %p346 = por %p344, %p345
    %s348 = sadd.s32 %s347, 1
    %p351 = scmp.eq.s32.totalorder %s25, 1
    %p352 = scmp.ne.s32.totalorder %s347, %s349
    %p353 = scmp.eq.s32.totalorder %s25, 0
    %p354 = por %p352, %p353
    %p355 = scmp.ne.s32.totalorder %s347, %s349
    %p356 = scmp.eq.s32.totalorder %s30, 1
    %p357 = por %p355, %p356
    %p358 = scmp.ne.s32.totalorder %s349, %s350
    %p359 = scmp.eq.s32.totalorder %s30, 0
    %p360 = por %p358, %p359
    %p361 = scmp.ne.s32.totalorder %s349, %s350
    %p362 = scmp.eq.s32.totalorder %s31, 1
    %p363 = por %p361, %p362
    %p365 = scmp.ne.s32.totalorder %s350, %s364
    %p366 = scmp.eq.s32.totalorder %s31, 0
    %p367 = por %p365, %p366
    %s368 = ssub.s32 %s25, %s32
    %p369 = scmp.eq.s32.totalorder %s368, 0
    %s371 = sadd.s32 %s370, 1
    %s372 = scalar_select %p369, %s370, %s371
    %p375 = pneg %p369
    %p376 = scmp.eq.s32.totalorder %s25, 1
    %p377 = por %p375, %p376
    %p378 = scmp.ne.s32.totalorder %s370, %s373
    %p379 = scmp.eq.s32.totalorder %s25, 0
    %p380 = por %p378, %p379
    %p381 = scmp.ne.s32.totalorder %s370, %s373
    %p382 = scmp.eq.s32.totalorder %s30, 1
    %p383 = por %p381, %p382
    %p384 = scmp.ne.s32.totalorder %s373, %s374
    %p385 = scmp.eq.s32.totalorder %s30, 0
    %p386 = por %p384, %p385
    %p387 = scmp.ne.s32.totalorder %s373, %s374
    %p388 = scmp.eq.s32.totalorder %s31, 1
    %p389 = por %p387, %p388
    %p391 = scmp.ne.s32.totalorder %s374, %s390
    %p392 = scmp.eq.s32.totalorder %s31, 0
    %p393 = por %p391, %p392
    %s395 = sadd.s32 %s394, 1
    %p398 = scmp.eq.s32.totalorder %s25, 1
    %p399 = scmp.ne.s32.totalorder %s394, %s396
    %p400 = scmp.eq.s32.totalorder %s25, 0
    %p401 = por %p399, %p400
    %p402 = scmp.ne.s32.totalorder %s394, %s396
    %p403 = scmp.eq.s32.totalorder %s30, 1
    %p404 = por %p402, %p403
    %p405 = scmp.ne.s32.totalorder %s396, %s397
    %p406 = scmp.eq.s32.totalorder %s30, 0
    %p407 = por %p405, %p406
    %p408 = scmp.ne.s32.totalorder %s396, %s397
    %p409 = scmp.eq.s32.totalorder %s31, 1
    %p410 = por %p408, %p409
    %p412 = scmp.ne.s32.totalorder %s397, %s411
    %p413 = scmp.eq.s32.totalorder %s31, 0
    %p414 = por %p412, %p413
    %s416 = sadd.s32 %s415, 1
    %p419 = scmp.eq.s32.totalorder %s25, 1
    %p420 = scmp.ne.s32.totalorder %s415, %s417
    %p421 = scmp.eq.s32.totalorder %s25, 0
    %p422 = por %p420, %p421
    %p423 = scmp.ne.s32.totalorder %s415, %s417
    %p424 = scmp.eq.s32.totalorder %s30, 1
    %p425 = por %p423, %p424
    %p426 = scmp.ne.s32.totalorder %s417, %s418
    %p427 = scmp.eq.s32.totalorder %s30, 0
    %p428 = por %p426, %p427
    %p429 = scmp.ne.s32.totalorder %s417, %s418
    %p430 = scmp.eq.s32.totalorder %s31, 1
    %p431 = por %p429, %p430
    %p433 = scmp.ne.s32.totalorder %s418, %s432
    %p434 = scmp.eq.s32.totalorder %s31, 0
    %p435 = por %p433, %p434
    %s437 = sadd.s32 %s436, 1
    %p440 = scmp.eq.s32.totalorder %s25, 1
    %p441 = scmp.ne.s32.totalorder %s436, %s438
    %p442 = scmp.eq.s32.totalorder %s25, 0
    %p443 = por %p441, %p442
    %p444 = scmp.ne.s32.totalorder %s436, %s438
    %p445 = scmp.eq.s32.totalorder %s30, 1
    %p446 = por %p444, %p445
    %p447 = scmp.ne.s32.totalorder %s438, %s439
    %p448 = scmp.eq.s32.totalorder %s30, 0
    %p449 = por %p447, %p448
    %p450 = scmp.ne.s32.totalorder %s438, %s439
    %p451 = scmp.eq.s32.totalorder %s31, 1
    %p452 = por %p450, %p451
    %p454 = scmp.ne.s32.totalorder %s439, %s453
    %p455 = scmp.eq.s32.totalorder %s31, 0
    %p456 = por %p454, %p455
    %p457 = scmp.le.s32.totalorder 1, %s25
    %p458 = scmp.lt.s32.totalorder %s25, 3
    %p459 = pnand %p457, %p458
    %p460 = pneg %p459
    // Predicated region
    $region9: #{adamoco_forward.2} parent=5 // pred_check
      _
    $region10: #{adamoco_forward.2} parent=5 // pred_check_branch
      %462 = sbr.rel (%p459) target = $region12
    $region11: #{adamoco_forward.2} parent=5 // pred_region
      %s463 = ssub.s32 %s25, 1
      // Predicated region
      $region13: #{adamoco_forward.2} parent=11 // pred_check
        %p464 = pneg %p124
      $region14: #{adamoco_forward.2} parent=11 // pred_check_branch
        %466 = sbr.rel (%p464) target = $region16
      $region15: #{adamoco_forward.2} parent=11 // pred_region
        _
      $region16: #{adamoco_forward.2} parent=11 // pred_fallthru
        _
      // Predicated region
      $region17: #{adamoco_forward.2} parent=11 // pred_check
        %p467 = pneg %p145
      $region18: #{adamoco_forward.2} parent=11 // pred_check_branch
        %469 = sbr.rel (%p467) target = $region20
      $region19: #{adamoco_forward.2} parent=11 // pred_region
        _
      $region20: #{adamoco_forward.2} parent=11 // pred_fallthru
        _
      // Predicated region
      $region21: #{adamoco_forward.2} parent=11 // pred_check
        %p470 = pneg %p166
      $region22: #{adamoco_forward.2} parent=11 // pred_check_branch
        %472 = sbr.rel (%p470) target = $region24
      $region23: #{adamoco_forward.2} parent=11 // pred_region
        _
      $region24: #{adamoco_forward.2} parent=11 // pred_fallthru
        _
      // Predicated region
      $region25: #{adamoco_forward.2} parent=11 // pred_check
        %p473 = pneg %p213
      $region26: #{adamoco_forward.2} parent=11 // pred_check_branch
        %475 = sbr.rel (%p473) target = $region28
      $region27: #{adamoco_forward.2} parent=11 // pred_region
        _
      $region28: #{adamoco_forward.2} parent=11 // pred_fallthru
        _
      // Predicated region
      $region29: #{adamoco_forward.2} parent=11 // pred_check
        %p476 = pneg %p234
      $region30: #{adamoco_forward.2} parent=11 // pred_check_branch
        %478 = sbr.rel (%p476) target = $region32
      $region31: #{adamoco_forward.2} parent=11 // pred_region
        _
      $region32: #{adamoco_forward.2} parent=11 // pred_fallthru
        _
      // Predicated region
      $region33: #{adamoco_forward.2} parent=11 // pred_check
        %p479 = pneg %p255
      $region34: #{adamoco_forward.2} parent=11 // pred_check_branch
        %481 = sbr.rel (%p479) target = $region36
      $region35: #{adamoco_forward.2} parent=11 // pred_region
        _
      $region36: #{adamoco_forward.2} parent=11 // pred_fallthru
        _
    $region12: #{adamoco_forward.2} parent=5 // pred_fallthru
      _
    %p482 = scmp.lt.s32.totalorder %s25, 2
    // Predicated region
    $region37: #{adamoco_forward.2} parent=5 // pred_check
      %p483 = pneg %p482
    $region38: #{adamoco_forward.2} parent=5 // pred_check_branch
      %485 = sbr.rel (%p483) target = $region40
    $region39: #{adamoco_forward.2} parent=5 // pred_region
      // Predicated region
      $region41: #{adamoco_forward.2} parent=39 // pred_check
        %p486 = pneg %p45
      $region42: #{adamoco_forward.2} parent=39 // pred_check_branch
        %488 = sbr.rel (%p486) target = $region44
      $region43: #{adamoco_forward.2} parent=39 // pred_region
        %s489 = smul.u32 4, %s25
        %p490 = scmp.lt.s32.totalorder %s489, 7
        %s491 = scalar_select %p490, %s489, 7
        %s492 = smul.addr %s491, 4
        %s493 = scalar_lea.vmem %s0, %s492
        %s494 = smul.u32 4, %s25
      $region44: #{adamoco_forward.2} parent=39 // pred_fallthru
        _
      // Predicated region
      $region45: #{adamoco_forward.2} parent=39 // pred_check
        %p495 = pneg %p71
      $region46: #{adamoco_forward.2} parent=39 // pred_check_branch
        %497 = sbr.rel (%p495) target = $region48
      $region47: #{adamoco_forward.2} parent=39 // pred_region
        %s498 = smul.u32 4, %s25
        %p499 = scmp.lt.s32.totalorder %s498, 7
        %s500 = scalar_select %p499, %s498, 7
        %s501 = smul.addr %s500, 4
        %s502 = scalar_lea.vmem %s1, %s501
        %s503 = smul.u32 4, %s25
      $region48: #{adamoco_forward.2} parent=39 // pred_fallthru
        _
      // Predicated region
      $region49: #{adamoco_forward.2} parent=39 // pred_check
        %p504 = pneg %p97
      $region50: #{adamoco_forward.2} parent=39 // pred_check_branch
        %506 = sbr.rel (%p504) target = $region52
      $region51: #{adamoco_forward.2} parent=39 // pred_region
        %s507 = smul.u32 64, %s25
        %p508 = scmp.lt.s32.totalorder %s507, 127
        %s509 = scalar_select %p508, %s507, 127
        %s510 = smul.addr %s509, 8
        %s511 = scalar_lea.vmem %s2, %s510
        %s512 = smul.u32 64, %s25
      $region52: #{adamoco_forward.2} parent=39 // pred_fallthru
        _
      // Predicated region
      $region53: #{adamoco_forward.2} parent=39 // pred_check
        %p513 = pneg %p186
      $region54: #{adamoco_forward.2} parent=39 // pred_check_branch
        %515 = sbr.rel (%p513) target = $region56
      $region55: #{adamoco_forward.2} parent=39 // pred_region
        %s516 = smul.u32 64, %s25
        %p517 = scmp.lt.s32.totalorder %s516, 127
        %s518 = scalar_select %p517, %s516, 127
        %s519 = smul.addr %s518, 8
        %s520 = scalar_lea.vmem %s6, %s519
        %s521 = smul.u32 64, %s25
      $region56: #{adamoco_forward.2} parent=39 // pred_fallthru
        _
    $region40: #{adamoco_forward.2} parent=5 // pred_fallthru
      _
    %p522 = scmp.le.s32.totalorder 1, %s25
    %p523 = scmp.lt.s32.totalorder %s25, 3
    %p524 = pnand %p522, %p523
    %p525 = pneg %p524
    // Predicated region
    $region57: #{adamoco_forward.2} parent=5 // pred_check
      _
    $region58: #{adamoco_forward.2} parent=5 // pred_check_branch
      %527 = sbr.rel (%p524) target = $region60
    $region59: #{adamoco_forward.2} parent=5 // pred_region
      %s528 = ssub.s32 %s25, 1
      %s529 = smul.u32 4, %s30
      %p530 = scmp.lt.s32.totalorder %s529, 7
      %s531 = scalar_select %p530, %s529, 7
      %s532 = smul.addr %s531, 4
      %s533 = scalar_lea.vmem %s0, %s532
      %p534 = pneg %p51
      %p535 = pneg %p48
      %s536 = smul.u32 4, %s30
      %p537 = scmp.lt.s32.totalorder %s536, 7
      %s538 = scalar_select %p537, %s536, 7
      %s539 = smul.addr %s538, 4
      %s540 = scalar_lea.vmem %s1, %s539
      %p541 = pneg %p77
      %p542 = pneg %p74
      %s543 = smul.u32 64, %s30
      %p544 = scmp.lt.s32.totalorder %s543, 127
      %s545 = scalar_select %p544, %s543, 127
      %s546 = smul.addr %s545, 8
      %s547 = scalar_lea.vmem %s2, %s546
      %p548 = pneg %p103
      %p549 = pneg %p100
      %p550 = pneg %p124
      %p551 = pneg %p121
      %p552 = pneg %p145
      %p553 = pneg %p142
      %p554 = pneg %p166
      %p555 = pneg %p163
      %s556 = smul.u32 64, %s30
      %p557 = scmp.lt.s32.totalorder %s556, 127
      %s558 = scalar_select %p557, %s556, 127
      %s559 = smul.addr %s558, 8
      %s560 = scalar_lea.vmem %s6, %s559
      %p561 = pneg %p192
      %p562 = pneg %p189
      %p563 = pneg %p213
      %p564 = pneg %p210
      %p565 = pneg %p234
      %p566 = pneg %p231
      %p567 = pneg %p255
      %p568 = pneg %p252
      %p569 = pneg %p276
      %p570 = pneg %p273
      %p571 = pneg %p297
      %p572 = pneg %p294
      %p573 = pneg %p318
      %p574 = pneg %p315
      %p575 = pneg %p339
      %p576 = pneg %p336
      %p577 = pneg %p360
      %p578 = pneg %p357
      %p579 = pneg %p386
      %p580 = pneg %p383
      %s581 = smul.u32 64, %s30
      %p582 = scmp.lt.s32.totalorder %s581, 127
      %s583 = scalar_select %p582, %s581, 127
      %s584 = smul.addr %s583, 8
      %s585 = scalar_lea.vmem %s15, %s584
      %p586 = pneg %p407
      %p587 = pneg %p404
      %p588 = pneg %p428
      %p589 = pneg %p425
      %p590 = pneg %p449
      %p591 = pneg %p446
      %s592 = smul.u32 4, %s30
      %p593 = scmp.lt.s32.totalorder %s592, 7
      %s594 = scalar_select %p593, %s592, 7
      %s595 = smul.addr %s594, 4
      %s596 = scalar_lea.vmem %s0, %s595
      %s597 = smul.u32 4, %s30
      %s598 = smul.u32 4, %s30
      %p599 = scmp.lt.s32.totalorder %s598, 7
      %s600 = scalar_select %p599, %s598, 7
      %s601 = smul.addr %s600, 4
      %s602 = scalar_lea.vmem %s1, %s601
      %s603 = smul.u32 4, %s30
      %s604 = smul.u32 64, %s30
      %p605 = scmp.lt.s32.totalorder %s604, 127
      %s606 = scalar_select %p605, %s604, 127
      %s607 = smul.addr %s606, 8
      %s608 = scalar_lea.vmem %s2, %s607
      %s609 = smul.u32 64, %s30
      %s610 = smul.u32 64, %s30
      %p611 = scmp.lt.s32.totalorder %s610, 127
      %s612 = scalar_select %p611, %s610, 127
      %s613 = smul.addr %s612, 8
      %s614 = scalar_lea.vmem %s6, %s613
      %s615 = smul.u32 64, %s30
      %s616 = smul.u32 64, %s30
      %p617 = scmp.lt.s32.totalorder %s616, 127
      %s618 = scalar_select %p617, %s616, 127
      %s619 = smul.addr %s618, 8
      %s620 = scalar_lea.vmem %s15, %s619
      %s621 = smul.u32 64, %s30
      %p623 = scmp.eq.s32.totalorder %s30, 0
      // Predicated region
      $region61: #{adamoco_forward.2} parent=59 // pred_check
        %p624 = pneg %p623
      $region62: #{adamoco_forward.2} parent=59 // pred_check_branch
        %626 = sbr.rel (%p624) target = $region64
      $region63: #{adamoco_forward.2} parent=59 // pred_region
        %627 = vst [vmem:[#allocation2] sm:$0xff] 0.0
        %628 = vst [vmem:[#allocation3] sm:$0xff] 0.0
      $region64: #{adamoco_forward.2} parent=59 // pred_fallthru
        _
      %v629 = vld [vmem:[%s614] sm:$0xff]
      %v630 = vld [vmem:[%s614 + $0x8] sm:$0xff]
      %v631 = vld [vmem:[%s614 + $0x10] sm:$0xff]
      %v632 = vld [vmem:[%s614 + $0x18] sm:$0xff]
      %v633 = vld [vmem:[%s614 + $0x20] sm:$0xff]
      %v634 = vld [vmem:[%s614 + $0x28] sm:$0xff]
      %v635 = vld [vmem:[%s614 + $0x30] sm:$0xff]
      %v636 = vld [vmem:[%s614 + $0x38] sm:$0xff]
      %v637 = vld [vmem:[%s614 + $0x40] sm:$0xff]
      %v638 = vld [vmem:[%s614 + $0x48] sm:$0xff]
      %v639 = vld [vmem:[%s614 + $0x50] sm:$0xff]
      %v640 = vld [vmem:[%s614 + $0x58] sm:$0xff]
      %v641 = vld [vmem:[%s614 + $0x60] sm:$0xff]
      %v642 = vld [vmem:[%s614 + $0x68] sm:$0xff]
      %v643 = vld [vmem:[%s614 + $0x70] sm:$0xff]
      %v644 = vld [vmem:[%s614 + $0x78] sm:$0xff]
      %v645 = vld [vmem:[%s614 + $0x80] sm:$0xff]
      %v646 = vld [vmem:[%s614 + $0x88] sm:$0xff]
      %v647 = vld [vmem:[%s614 + $0x90] sm:$0xff]
      %v648 = vld [vmem:[%s614 + $0x98] sm:$0xff]
      %v649 = vld [vmem:[%s614 + $0xa0] sm:$0xff]
      %v650 = vld [vmem:[%s614 + $0xa8] sm:$0xff]
      %v651 = vld [vmem:[%s614 + $0xb0] sm:$0xff]
      %v652 = vld [vmem:[%s614 + $0xb8] sm:$0xff]
      %v653 = vld [vmem:[%s614 + $0xc0] sm:$0xff]
      %v654 = vld [vmem:[%s614 + $0xc8] sm:$0xff]
      %v655 = vld [vmem:[%s614 + $0xd0] sm:$0xff]
      %v656 = vld [vmem:[%s614 + $0xd8] sm:$0xff]
      %v657 = vld [vmem:[%s614 + $0xe0] sm:$0xff]
      %v658 = vld [vmem:[%s614 + $0xe8] sm:$0xff]
      %v659 = vld [vmem:[%s614 + $0xf0] sm:$0xff]
      %v660 = vld [vmem:[%s614 + $0xf8] sm:$0xff]
      %v661 = vld [vmem:[%s614 + $0x100] sm:$0xff]
      %v662 = vld [vmem:[%s614 + $0x108] sm:$0xff]
      %v663 = vld [vmem:[%s614 + $0x110] sm:$0xff]
      %v664 = vld [vmem:[%s614 + $0x118] sm:$0xff]
      %v665 = vld [vmem:[%s614 + $0x120] sm:$0xff]
      %v666 = vld [vmem:[%s614 + $0x128] sm:$0xff]
      %v667 = vld [vmem:[%s614 + $0x130] sm:$0xff]
      %v668 = vld [vmem:[%s614 + $0x138] sm:$0xff]
      %v669 = vld [vmem:[%s614 + $0x140] sm:$0xff]
      %v670 = vld [vmem:[%s614 + $0x148] sm:$0xff]
      %v671 = vld [vmem:[%s614 + $0x150] sm:$0xff]
      %v672 = vld [vmem:[%s614 + $0x158] sm:$0xff]
      %v673 = vld [vmem:[%s614 + $0x160] sm:$0xff]
      %v674 = vld [vmem:[%s614 + $0x168] sm:$0xff]
      %v675 = vld [vmem:[%s614 + $0x170] sm:$0xff]
      %v676 = vld [vmem:[%s614 + $0x178] sm:$0xff]
      %v677 = vld [vmem:[%s614 + $0x180] sm:$0xff]
      %v678 = vld [vmem:[%s614 + $0x188] sm:$0xff]
      %v679 = vld [vmem:[%s614 + $0x190] sm:$0xff]
      %v680 = vld [vmem:[%s614 + $0x198] sm:$0xff]
      %v681 = vld [vmem:[%s614 + $0x1a0] sm:$0xff]
      %v682 = vld [vmem:[%s614 + $0x1a8] sm:$0xff]
      %v683 = vld [vmem:[%s614 + $0x1b0] sm:$0xff]
      %v684 = vld [vmem:[%s614 + $0x1b8] sm:$0xff]
      %v685 = vld [vmem:[%s614 + $0x1c0] sm:$0xff]
      %v686 = vld [vmem:[%s614 + $0x1c8] sm:$0xff]
      %v687 = vld [vmem:[%s614 + $0x1d0] sm:$0xff]
      %v688 = vld [vmem:[%s614 + $0x1d8] sm:$0xff]
      %v689 = vld [vmem:[%s614 + $0x1e0] sm:$0xff]
      %v690 = vld [vmem:[%s614 + $0x1e8] sm:$0xff]
      %v691 = vld [vmem:[%s614 + $0x1f0] sm:$0xff]
      %v692 = vld [vmem:[%s614 + $0x1f8] sm:$0xff]
      %v693 = vmul.f32 %v629, 0.999
      %v694 = vmul.f32 %v630, 0.999
      %v695 = vmul.f32 %v631, 0.999
      %v696 = vmul.f32 %v632, 0.999
      %v697 = vmul.f32 %v633, 0.999
      %v698 = vmul.f32 %v634, 0.999
      %v699 = vmul.f32 %v635, 0.999
      %v700 = vmul.f32 %v636, 0.999
      %v701 = vmul.f32 %v637, 0.999
      %v702 = vmul.f32 %v638, 0.999
      %v703 = vmul.f32 %v639, 0.999
      %v704 = vmul.f32 %v640, 0.999
      %v705 = vmul.f32 %v641, 0.999
      %v706 = vmul.f32 %v642, 0.999
      %v707 = vmul.f32 %v643, 0.999
      %v708 = vmul.f32 %v644, 0.999
      %v709 = vmul.f32 %v645, 0.999
      %v710 = vmul.f32 %v646, 0.999
      %v711 = vmul.f32 %v647, 0.999
      %v712 = vmul.f32 %v648, 0.999
      %v713 = vmul.f32 %v649, 0.999
      %v714 = vmul.f32 %v650, 0.999
      %v715 = vmul.f32 %v651, 0.999
      %v716 = vmul.f32 %v652, 0.999
      %v717 = vmul.f32 %v653, 0.999
      %v718 = vmul.f32 %v654, 0.999
      %v719 = vmul.f32 %v655, 0.999
      %v720 = vmul.f32 %v656, 0.999
      %v721 = vmul.f32 %v657, 0.999
      %v722 = vmul.f32 %v658, 0.999
      %v723 = vmul.f32 %v659, 0.999
      %v724 = vmul.f32 %v660, 0.999
      %v725 = vmul.f32 %v661, 0.999
      %v726 = vmul.f32 %v662, 0.999
      %v727 = vmul.f32 %v663, 0.999
      %v728 = vmul.f32 %v664, 0.999
      %v729 = vmul.f32 %v665, 0.999
      %v730 = vmul.f32 %v666, 0.999
      %v731 = vmul.f32 %v667, 0.999
      %v732 = vmul.f32 %v668, 0.999
      %v733 = vmul.f32 %v669, 0.999
      %v734 = vmul.f32 %v670, 0.999
      %v735 = vmul.f32 %v671, 0.999
      %v736 = vmul.f32 %v672, 0.999
      %v737 = vmul.f32 %v673, 0.999
      %v738 = vmul.f32 %v674, 0.999
      %v739 = vmul.f32 %v675, 0.999
      %v740 = vmul.f32 %v676, 0.999
      %v741 = vmul.f32 %v677, 0.999
      %v742 = vmul.f32 %v678, 0.999
      %v743 = vmul.f32 %v679, 0.999
      %v744 = vmul.f32 %v680, 0.999
      %v745 = vmul.f32 %v681, 0.999
      %v746 = vmul.f32 %v682, 0.999
      %v747 = vmul.f32 %v683, 0.999
      %v748 = vmul.f32 %v684, 0.999
      %v749 = vmul.f32 %v685, 0.999
      %v750 = vmul.f32 %v686, 0.999
      %v751 = vmul.f32 %v687, 0.999
      %v752 = vmul.f32 %v688, 0.999
      %v753 = vmul.f32 %v689, 0.999
      %v754 = vmul.f32 %v690, 0.999
      %v755 = vmul.f32 %v691, 0.999
      %v756 = vmul.f32 %v692, 0.999
      %v757 = vld [vmem:[%s608] sm:$0xff]
      %v758 = vld [vmem:[%s608 + $0x8] sm:$0xff]
      %v759 = vld [vmem:[%s608 + $0x10] sm:$0xff]
      %v760 = vld [vmem:[%s608 + $0x18] sm:$0xff]
      %v761 = vld [vmem:[%s608 + $0x20] sm:$0xff]
      %v762 = vld [vmem:[%s608 + $0x28] sm:$0xff]
      %v763 = vld [vmem:[%s608 + $0x30] sm:$0xff]
      %v764 = vld [vmem:[%s608 + $0x38] sm:$0xff]
      %v765 = vld [vmem:[%s608 + $0x40] sm:$0xff]
      %v766 = vld [vmem:[%s608 + $0x48] sm:$0xff]
      %v767 = vld [vmem:[%s608 + $0x50] sm:$0xff]
      %v768 = vld [vmem:[%s608 + $0x58] sm:$0xff]
      %v769 = vld [vmem:[%s608 + $0x60] sm:$0xff]
      %v770 = vld [vmem:[%s608 + $0x68] sm:$0xff]
      %v771 = vld [vmem:[%s608 + $0x70] sm:$0xff]
      %v772 = vld [vmem:[%s608 + $0x78] sm:$0xff]
      %v773 = vld [vmem:[%s608 + $0x80] sm:$0xff]
      %v774 = vld [vmem:[%s608 + $0x88] sm:$0xff]
      %v775 = vld [vmem:[%s608 + $0x90] sm:$0xff]
      %v776 = vld [vmem:[%s608 + $0x98] sm:$0xff]
      %v777 = vld [vmem:[%s608 + $0xa0] sm:$0xff]
      %v778 = vld [vmem:[%s608 + $0xa8] sm:$0xff]
      %v779 = vld [vmem:[%s608 + $0xb0] sm:$0xff]
      %v780 = vld [vmem:[%s608 + $0xb8] sm:$0xff]
      %v781 = vld [vmem:[%s608 + $0xc0] sm:$0xff]
      %v782 = vld [vmem:[%s608 + $0xc8] sm:$0xff]
      %v783 = vld [vmem:[%s608 + $0xd0] sm:$0xff]
      %v784 = vld [vmem:[%s608 + $0xd8] sm:$0xff]
      %v785 = vld [vmem:[%s608 + $0xe0] sm:$0xff]
      %v786 = vld [vmem:[%s608 + $0xe8] sm:$0xff]
      %v787 = vld [vmem:[%s608 + $0xf0] sm:$0xff]
      %v788 = vld [vmem:[%s608 + $0xf8] sm:$0xff]
      %v789 = vld [vmem:[%s608 + $0x100] sm:$0xff]
      %v790 = vld [vmem:[%s608 + $0x108] sm:$0xff]
      %v791 = vld [vmem:[%s608 + $0x110] sm:$0xff]
      %v792 = vld [vmem:[%s608 + $0x118] sm:$0xff]
      %v793 = vld [vmem:[%s608 + $0x120] sm:$0xff]
      %v794 = vld [vmem:[%s608 + $0x128] sm:$0xff]
      %v795 = vld [vmem:[%s608 + $0x130] sm:$0xff]
      %v796 = vld [vmem:[%s608 + $0x138] sm:$0xff]
      %v797 = vld [vmem:[%s608 + $0x140] sm:$0xff]
      %v798 = vld [vmem:[%s608 + $0x148] sm:$0xff]
      %v799 = vld [vmem:[%s608 + $0x150] sm:$0xff]
      %v800 = vld [vmem:[%s608 + $0x158] sm:$0xff]
      %v801 = vld [vmem:[%s608 + $0x160] sm:$0xff]
      %v802 = vld [vmem:[%s608 + $0x168] sm:$0xff]
      %v803 = vld [vmem:[%s608 + $0x170] sm:$0xff]
      %v804 = vld [vmem:[%s608 + $0x178] sm:$0xff]
      %v805 = vld [vmem:[%s608 + $0x180] sm:$0xff]
      %v806 = vld [vmem:[%s608 + $0x188] sm:$0xff]
      %v807 = vld [vmem:[%s608 + $0x190] sm:$0xff]
      %v808 = vld [vmem:[%s608 + $0x198] sm:$0xff]
      %v809 = vld [vmem:[%s608 + $0x1a0] sm:$0xff]
      %v810 = vld [vmem:[%s608 + $0x1a8] sm:$0xff]
      %v811 = vld [vmem:[%s608 + $0x1b0] sm:$0xff]
      %v812 = vld [vmem:[%s608 + $0x1b8] sm:$0xff]
      %v813 = vld [vmem:[%s608 + $0x1c0] sm:$0xff]
      %v814 = vld [vmem:[%s608 + $0x1c8] sm:$0xff]
      %v815 = vld [vmem:[%s608 + $0x1d0] sm:$0xff]
      %v816 = vld [vmem:[%s608 + $0x1d8] sm:$0xff]
      %v817 = vld [vmem:[%s608 + $0x1e0] sm:$0xff]
      %v818 = vld [vmem:[%s608 + $0x1e8] sm:$0xff]
      %v819 = vld [vmem:[%s608 + $0x1f0] sm:$0xff]
      %v820 = vld [vmem:[%s608 + $0x1f8] sm:$0xff]
      %v821 = vmul.f32 %v757, 0.001
      %v822 = vmul.f32 %v758, 0.001
      %v823 = vmul.f32 %v759, 0.001
      %v824 = vmul.f32 %v760, 0.001
      %v825 = vmul.f32 %v761, 0.001
      %v826 = vmul.f32 %v762, 0.001
      %v827 = vmul.f32 %v763, 0.001
      %v828 = vmul.f32 %v764, 0.001
      %v829 = vmul.f32 %v765, 0.001
      %v830 = vmul.f32 %v766, 0.001
      %v831 = vmul.f32 %v767, 0.001
      %v832 = vmul.f32 %v768, 0.001
      %v833 = vmul.f32 %v769, 0.001
      %v834 = vmul.f32 %v770, 0.001
      %v835 = vmul.f32 %v771, 0.001
      %v836 = vmul.f32 %v772, 0.001
      %v837 = vmul.f32 %v773, 0.001
      %v838 = vmul.f32 %v774, 0.001
      %v839 = vmul.f32 %v775, 0.001
      %v840 = vmul.f32 %v776, 0.001
      %v841 = vmul.f32 %v777, 0.001
      %v842 = vmul.f32 %v778, 0.001
      %v843 = vmul.f32 %v779, 0.001
      %v844 = vmul.f32 %v780, 0.001
      %v845 = vmul.f32 %v781, 0.001
      %v846 = vmul.f32 %v782, 0.001
      %v847 = vmul.f32 %v783, 0.001
      %v848 = vmul.f32 %v784, 0.001
      %v849 = vmul.f32 %v785, 0.001
      %v850 = vmul.f32 %v786, 0.001
      %v851 = vmul.f32 %v787, 0.001
      %v852 = vmul.f32 %v788, 0.001
      %v853 = vmul.f32 %v789, 0.001
      %v854 = vmul.f32 %v790, 0.001
      %v855 = vmul.f32 %v791, 0.001
      %v856 = vmul.f32 %v792, 0.001
      %v857 = vmul.f32 %v793, 0.001
      %v858 = vmul.f32 %v794, 0.001
      %v859 = vmul.f32 %v795, 0.001
      %v860 = vmul.f32 %v796, 0.001
      %v861 = vmul.f32 %v797, 0.001
      %v862 = vmul.f32 %v798, 0.001
      %v863 = vmul.f32 %v799, 0.001
      %v864 = vmul.f32 %v800, 0.001
      %v865 = vmul.f32 %v801, 0.001
      %v866 = vmul.f32 %v802, 0.001
      %v867 = vmul.f32 %v803, 0.001
      %v868 = vmul.f32 %v804, 0.001
      %v869 = vmul.f32 %v805, 0.001
      %v870 = vmul.f32 %v806, 0.001
      %v871 = vmul.f32 %v807, 0.001
      %v872 = vmul.f32 %v808, 0.001
      %v873 = vmul.f32 %v809, 0.001
      %v874 = vmul.f32 %v810, 0.001
      %v875 = vmul.f32 %v811, 0.001
      %v876 = vmul.f32 %v812, 0.001
      %v877 = vmul.f32 %v813, 0.001
      %v878 = vmul.f32 %v814, 0.001
      %v879 = vmul.f32 %v815, 0.001
      %v880 = vmul.f32 %v816, 0.001
      %v881 = vmul.f32 %v817, 0.001
      %v882 = vmul.f32 %v818, 0.001
      %v883 = vmul.f32 %v819, 0.001
      %v884 = vmul.f32 %v820, 0.001
      %v885 = vadd.f32 %v693, %v821
      %v886 = vadd.f32 %v694, %v822
      %v887 = vadd.f32 %v695, %v823
      %v888 = vadd.f32 %v696, %v824
      %v889 = vadd.f32 %v697, %v825
      %v890 = vadd.f32 %v698, %v826
      %v891 = vadd.f32 %v699, %v827
      %v892 = vadd.f32 %v700, %v828
      %v893 = vadd.f32 %v701, %v829
      %v894 = vadd.f32 %v702, %v830
      %v895 = vadd.f32 %v703, %v831
      %v896 = vadd.f32 %v704, %v832
      %v897 = vadd.f32 %v705, %v833
      %v898 = vadd.f32 %v706, %v834
      %v899 = vadd.f32 %v707, %v835
      %v900 = vadd.f32 %v708, %v836
      %v901 = vadd.f32 %v709, %v837
      %v902 = vadd.f32 %v710, %v838
      %v903 = vadd.f32 %v711, %v839
      %v904 = vadd.f32 %v712, %v840
      %v905 = vadd.f32 %v713, %v841
      %v906 = vadd.f32 %v714, %v842
      %v907 = vadd.f32 %v715, %v843
      %v908 = vadd.f32 %v716, %v844
      %v909 = vadd.f32 %v717, %v845
      %v910 = vadd.f32 %v718, %v846
      %v911 = vadd.f32 %v719, %v847
      %v912 = vadd.f32 %v720, %v848
      %v913 = vadd.f32 %v721, %v849
      %v914 = vadd.f32 %v722, %v850
      %v915 = vadd.f32 %v723, %v851
      %v916 = vadd.f32 %v724, %v852
      %v917 = vadd.f32 %v725, %v853
      %v918 = vadd.f32 %v726, %v854
      %v919 = vadd.f32 %v727, %v855
      %v920 = vadd.f32 %v728, %v856
      %v921 = vadd.f32 %v729, %v857
      %v922 = vadd.f32 %v730, %v858
      %v923 = vadd.f32 %v731, %v859
      %v924 = vadd.f32 %v732, %v860
      %v925 = vadd.f32 %v733, %v861
      %v926 = vadd.f32 %v734, %v862
      %v927 = vadd.f32 %v735, %v863
      %v928 = vadd.f32 %v736, %v864
      %v929 = vadd.f32 %v737, %v865
      %v930 = vadd.f32 %v738, %v866
      %v931 = vadd.f32 %v739, %v867
      %v932 = vadd.f32 %v740, %v868
      %v933 = vadd.f32 %v741, %v869
      %v934 = vadd.f32 %v742, %v870
      %v935 = vadd.f32 %v743, %v871
      %v936 = vadd.f32 %v744, %v872
      %v937 = vadd.f32 %v745, %v873
      %v938 = vadd.f32 %v746, %v874
      %v939 = vadd.f32 %v747, %v875
      %v940 = vadd.f32 %v748, %v876
      %v941 = vadd.f32 %v749, %v877
      %v942 = vadd.f32 %v750, %v878
      %v943 = vadd.f32 %v751, %v879
      %v944 = vadd.f32 %v752, %v880
      %v945 = vadd.f32 %v753, %v881
      %v946 = vadd.f32 %v754, %v882
      %v947 = vadd.f32 %v755, %v883
      %v948 = vadd.f32 %v756, %v884
      %949 = vst [vmem:[%s620] sm:$0xff] %v885
      %950 = vst [vmem:[%s620 + $0x8] sm:$0xff] %v886
      %951 = vst [vmem:[%s620 + $0x10] sm:$0xff] %v887
      %952 = vst [vmem:[%s620 + $0x18] sm:$0xff] %v888
      %953 = vst [vmem:[%s620 + $0x20] sm:$0xff] %v889
      %954 = vst [vmem:[%s620 + $0x28] sm:$0xff] %v890
      %955 = vst [vmem:[%s620 + $0x30] sm:$0xff] %v891
      %956 = vst [vmem:[%s620 + $0x38] sm:$0xff] %v892
      %957 = vst [vmem:[%s620 + $0x40] sm:$0xff] %v893
      %958 = vst [vmem:[%s620 + $0x48] sm:$0xff] %v894
      %959 = vst [vmem:[%s620 + $0x50] sm:$0xff] %v895
      %960 = vst [vmem:[%s620 + $0x58] sm:$0xff] %v896
      %961 = vst [vmem:[%s620 + $0x60] sm:$0xff] %v897
      %962 = vst [vmem:[%s620 + $0x68] sm:$0xff] %v898
      %963 = vst [vmem:[%s620 + $0x70] sm:$0xff] %v899
      %964 = vst [vmem:[%s620 + $0x78] sm:$0xff] %v900
      %965 = vst [vmem:[%s620 + $0x80] sm:$0xff] %v901
      %966 = vst [vmem:[%s620 + $0x88] sm:$0xff] %v902
      %967 = vst [vmem:[%s620 + $0x90] sm:$0xff] %v903
      %968 = vst [vmem:[%s620 + $0x98] sm:$0xff] %v904
      %969 = vst [vmem:[%s620 + $0xa0] sm:$0xff] %v905
      %970 = vst [vmem:[%s620 + $0xa8] sm:$0xff] %v906
      %971 = vst [vmem:[%s620 + $0xb0] sm:$0xff] %v907
      %972 = vst [vmem:[%s620 + $0xb8] sm:$0xff] %v908
      %973 = vst [vmem:[%s620 + $0xc0] sm:$0xff] %v909
      %974 = vst [vmem:[%s620 + $0xc8] sm:$0xff] %v910
      %975 = vst [vmem:[%s620 + $0xd0] sm:$0xff] %v911
      %976 = vst [vmem:[%s620 + $0xd8] sm:$0xff] %v912
      %977 = vst [vmem:[%s620 + $0xe0] sm:$0xff] %v913
      %978 = vst [vmem:[%s620 + $0xe8] sm:$0xff] %v914
      %979 = vst [vmem:[%s620 + $0xf0] sm:$0xff] %v915
      %980 = vst [vmem:[%s620 + $0xf8] sm:$0xff] %v916
      %981 = vst [vmem:[%s620 + $0x100] sm:$0xff] %v917
      %982 = vst [vmem:[%s620 + $0x108] sm:$0xff] %v918
      %983 = vst [vmem:[%s620 + $0x110] sm:$0xff] %v919
      %984 = vst [vmem:[%s620 + $0x118] sm:$0xff] %v920
      %985 = vst [vmem:[%s620 + $0x120] sm:$0xff] %v921
      %986 = vst [vmem:[%s620 + $0x128] sm:$0xff] %v922
      %987 = vst [vmem:[%s620 + $0x130] sm:$0xff] %v923
      %988 = vst [vmem:[%s620 + $0x138] sm:$0xff] %v924
      %989 = vst [vmem:[%s620 + $0x140] sm:$0xff] %v925
      %990 = vst [vmem:[%s620 + $0x148] sm:$0xff] %v926
      %991 = vst [vmem:[%s620 + $0x150] sm:$0xff] %v927
      %992 = vst [vmem:[%s620 + $0x158] sm:$0xff] %v928
      %993 = vst [vmem:[%s620 + $0x160] sm:$0xff] %v929
      %994 = vst [vmem:[%s620 + $0x168] sm:$0xff] %v930
      %995 = vst [vmem:[%s620 + $0x170] sm:$0xff] %v931
      %996 = vst [vmem:[%s620 + $0x178] sm:$0xff] %v932
      %997 = vst [vmem:[%s620 + $0x180] sm:$0xff] %v933
      %998 = vst [vmem:[%s620 + $0x188] sm:$0xff] %v934
      %999 = vst [vmem:[%s620 + $0x190] sm:$0xff] %v935
      %1000 = vst [vmem:[%s620 + $0x198] sm:$0xff] %v936
      %1001 = vst [vmem:[%s620 + $0x1a0] sm:$0xff] %v937
      %1002 = vst [vmem:[%s620 + $0x1a8] sm:$0xff] %v938
      %1003 = vst [vmem:[%s620 + $0x1b0] sm:$0xff] %v939
      %1004 = vst [vmem:[%s620 + $0x1b8] sm:$0xff] %v940
      %1005 = vst [vmem:[%s620 + $0x1c0] sm:$0xff] %v941
      %1006 = vst [vmem:[%s620 + $0x1c8] sm:$0xff] %v942
      %1007 = vst [vmem:[%s620 + $0x1d0] sm:$0xff] %v943
      %1008 = vst [vmem:[%s620 + $0x1d8] sm:$0xff] %v944
      %1009 = vst [vmem:[%s620 + $0x1e0] sm:$0xff] %v945
      %1010 = vst [vmem:[%s620 + $0x1e8] sm:$0xff] %v946
      %1011 = vst [vmem:[%s620 + $0x1f0] sm:$0xff] %v947
      %1012 = vst [vmem:[%s620 + $0x1f8] sm:$0xff] %v948
      %v1013 = vld [vmem:[#allocation2] sm:$0xff]
      %v1014 = vld [vmem:[%s596] sm:$0xff]
      %v1015 = vld [vmem:[%s596 + $0x8] sm:$0xff]
      %v1016 = vld [vmem:[%s608] sm:$0xff]
      %v1017 = vld [vmem:[%s608 + $0x8] sm:$0xff]
      %v1018 = vld [vmem:[%s608 + $0x10] sm:$0xff]
      %v1019 = vld [vmem:[%s608 + $0x18] sm:$0xff]
      %v1020 = vld [vmem:[%s608 + $0x20] sm:$0xff]
      %v1021 = vld [vmem:[%s608 + $0x28] sm:$0xff]
      %v1022 = vld [vmem:[%s608 + $0x30] sm:$0xff]
      %v1023 = vld [vmem:[%s608 + $0x38] sm:$0xff]
      %v1024 = vld [vmem:[%s608 + $0x40] sm:$0xff]
      %v1025 = vld [vmem:[%s608 + $0x48] sm:$0xff]
      %v1026 = vld [vmem:[%s608 + $0x50] sm:$0xff]
      %v1027 = vld [vmem:[%s608 + $0x58] sm:$0xff]
      %v1028 = vld [vmem:[%s608 + $0x60] sm:$0xff]
      %v1029 = vld [vmem:[%s608 + $0x68] sm:$0xff]
      %v1030 = vld [vmem:[%s608 + $0x70] sm:$0xff]
      %v1031 = vld [vmem:[%s608 + $0x78] sm:$0xff]
      %v1032 = vld [vmem:[%s608 + $0x80] sm:$0xff]
      %v1033 = vld [vmem:[%s608 + $0x88] sm:$0xff]
      %v1034 = vld [vmem:[%s608 + $0x90] sm:$0xff]
      %v1035 = vld [vmem:[%s608 + $0x98] sm:$0xff]
      %v1036 = vld [vmem:[%s608 + $0xa0] sm:$0xff]
      %v1037 = vld [vmem:[%s608 + $0xa8] sm:$0xff]
      %v1038 = vld [vmem:[%s608 + $0xb0] sm:$0xff]
      %v1039 = vld [vmem:[%s608 + $0xb8] sm:$0xff]
      %v1040 = vld [vmem:[%s608 + $0xc0] sm:$0xff]
      %v1041 = vld [vmem:[%s608 + $0xc8] sm:$0xff]
      %v1042 = vld [vmem:[%s608 + $0xd0] sm:$0xff]
      %v1043 = vld [vmem:[%s608 + $0xd8] sm:$0xff]
      %v1044 = vld [vmem:[%s608 + $0xe0] sm:$0xff]
      %v1045 = vld [vmem:[%s608 + $0xe8] sm:$0xff]
      %v1046 = vld [vmem:[%s608 + $0xf0] sm:$0xff]
      %v1047 = vld [vmem:[%s608 + $0xf8] sm:$0xff]
      %v1048 = vld [vmem:[%s608 + $0x100] sm:$0xff]
      %v1049 = vld [vmem:[%s608 + $0x108] sm:$0xff]
      %v1050 = vld [vmem:[%s608 + $0x110] sm:$0xff]
      %v1051 = vld [vmem:[%s608 + $0x118] sm:$0xff]
      %v1052 = vld [vmem:[%s608 + $0x120] sm:$0xff]
      %v1053 = vld [vmem:[%s608 + $0x128] sm:$0xff]
      %v1054 = vld [vmem:[%s608 + $0x130] sm:$0xff]
      %v1055 = vld [vmem:[%s608 + $0x138] sm:$0xff]
      %v1056 = vld [vmem:[%s608 + $0x140] sm:$0xff]
      %v1057 = vld [vmem:[%s608 + $0x148] sm:$0xff]
      %v1058 = vld [vmem:[%s608 + $0x150] sm:$0xff]
      %v1059 = vld [vmem:[%s608 + $0x158] sm:$0xff]
      %v1060 = vld [vmem:[%s608 + $0x160] sm:$0xff]
      %v1061 = vld [vmem:[%s608 + $0x168] sm:$0xff]
      %v1062 = vld [vmem:[%s608 + $0x170] sm:$0xff]
      %v1063 = vld [vmem:[%s608 + $0x178] sm:$0xff]
      %v1064 = vld [vmem:[%s608 + $0x180] sm:$0xff]
      %v1065 = vld [vmem:[%s608 + $0x188] sm:$0xff]
      %v1066 = vld [vmem:[%s608 + $0x190] sm:$0xff]
      %v1067 = vld [vmem:[%s608 + $0x198] sm:$0xff]
      %v1068 = vld [vmem:[%s608 + $0x1a0] sm:$0xff]
      %v1069 = vld [vmem:[%s608 + $0x1a8] sm:$0xff]
      %v1070 = vld [vmem:[%s608 + $0x1b0] sm:$0xff]
      %v1071 = vld [vmem:[%s608 + $0x1b8] sm:$0xff]
      %v1072 = vld [vmem:[%s608 + $0x1c0] sm:$0xff]
      %v1073 = vld [vmem:[%s608 + $0x1c8] sm:$0xff]
      %v1074 = vld [vmem:[%s608 + $0x1d0] sm:$0xff]
      %v1075 = vld [vmem:[%s608 + $0x1d8] sm:$0xff]
      %v1076 = vld [vmem:[%s608 + $0x1e0] sm:$0xff]
      %v1077 = vld [vmem:[%s608 + $0x1e8] sm:$0xff]
      %v1078 = vld [vmem:[%s608 + $0x1f0] sm:$0xff]
      %v1079 = vld [vmem:[%s608 + $0x1f8] sm:$0xff]
      %v1080 = vpack.c.bf16 %v1017, %v1016
      %v1081 = vpack.c.bf16 %v1019, %v1018
      %v1082 = vpack.c.bf16 %v1021, %v1020
      %v1083 = vpack.c.bf16 %v1023, %v1022
      %v1084 = vpack.c.bf16 %v1025, %v1024
      %v1085 = vpack.c.bf16 %v1027, %v1026
      %v1086 = vpack.c.bf16 %v1029, %v1028
      %v1087 = vpack.c.bf16 %v1031, %v1030
      %v1088 = vpack.c.bf16 %v1033, %v1032
      %v1089 = vpack.c.bf16 %v1035, %v1034
      %v1090 = vpack.c.bf16 %v1037, %v1036
      %v1091 = vpack.c.bf16 %v1039, %v1038
      %v1092 = vpack.c.bf16 %v1041, %v1040
      %v1093 = vpack.c.bf16 %v1043, %v1042
      %v1094 = vpack.c.bf16 %v1045, %v1044
      %v1095 = vpack.c.bf16 %v1047, %v1046
      %v1096 = vpack.c.bf16 %v1049, %v1048
      %v1097 = vpack.c.bf16 %v1051, %v1050
      %v1098 = vpack.c.bf16 %v1053, %v1052
      %v1099 = vpack.c.bf16 %v1055, %v1054
      %v1100 = vpack.c.bf16 %v1057, %v1056
      %v1101 = vpack.c.bf16 %v1059, %v1058
      %v1102 = vpack.c.bf16 %v1061, %v1060
      %v1103 = vpack.c.bf16 %v1063, %v1062
      %v1104 = vpack.c.bf16 %v1065, %v1064
      %v1105 = vpack.c.bf16 %v1067, %v1066
      %v1106 = vpack.c.bf16 %v1069, %v1068
      %v1107 = vpack.c.bf16 %v1071, %v1070
      %v1108 = vpack.c.bf16 %v1073, %v1072
      %v1109 = vpack.c.bf16 %v1075, %v1074
      %v1110 = vpack.c.bf16 %v1077, %v1076
      %v1111 = vpack.c.bf16 %v1079, %v1078
      %v1114 = vunpack.c.l.b16 %v1014
      %v1115 = vunpack.c.h.b16 %v1014
      %v1116 = vunpack.c.l.b16 %v1015
      %v1117 = vunpack.c.h.b16 %v1015
      %v1118 = vpack.c.b16 %v1114, %v1114
      %v1119 = vpack.c.b16 %v1115, %v1115
      %v1120 = vpack.c.b16 %v1116, %v1116
      %v1121 = vpack.c.b16 %v1117, %v1117
      %1126 = vmatprep.subr.bf16.mxu0 0
      %1127 = vmatpush1.bf16.msra.mxu0 %v1080
      %1128 = vmatprep.subr.bf16.mxu0 0
      %1129 = vmatpush1.bf16.msra.mxu0 %v1081
      %1130 = vmatprep.subr.bf16.mxu0 0
      %1131 = vmatpush1.bf16.msra.mxu0 %v1082
      %1132 = vmatprep.subr.bf16.mxu0 0
      %1133 = vmatpush1.bf16.msra.mxu0 %v1083
      %1134 = vmatprep.subr.bf16.mxu0 0
      %1135 = vmatpush1.bf16.msra.mxu0 %v1084
      %1136 = vmatprep.subr.bf16.mxu0 0
      %1137 = vmatpush1.bf16.msra.mxu0 %v1085
      %1138 = vmatprep.subr.bf16.mxu0 0
      %1139 = vmatpush1.bf16.msra.mxu0 %v1086
      %1140 = vmatprep.subr.bf16.mxu0 0
      %1141 = vmatpush1.bf16.msra.mxu0 %v1087
      %1142 = vmatprep.subr.bf16.mxu0 0
      %1143 = vmatpush1.bf16.msra.mxu0 %v1088
      %1144 = vmatprep.subr.bf16.mxu0 0
      %1145 = vmatpush1.bf16.msra.mxu0 %v1089
      %1146 = vmatprep.subr.bf16.mxu0 0
      %1147 = vmatpush1.bf16.msra.mxu0 %v1090
      %1148 = vmatprep.subr.bf16.mxu0 0
      %1149 = vmatpush1.bf16.msra.mxu0 %v1091
      %1150 = vmatprep.subr.bf16.mxu0 0
      %1151 = vmatpush1.bf16.msra.mxu0 %v1092
      %1152 = vmatprep.subr.bf16.mxu0 0
      %1153 = vmatpush1.bf16.msra.mxu0 %v1093
      %1154 = vmatprep.subr.bf16.mxu0 0
      %1155 = vmatpush1.bf16.msra.mxu0 %v1094
      %1156 = vmatprep.subr.bf16.mxu0 0
      %1157 = vmatpush1.bf16.msra.mxu0 %v1095
      %1158 = vmatprep.mubr.bf16.mxu0 %v1119
      %1159 = vmatmul.mubr.bf16.gmra.mrb[0].mxu0 %v1118
      %v1160 = vpop.f32.mrb[0].mxu0
      %v1161 = vadd.f32 0.0, %v1160
      %v1162 = vpop.f32.mrb[0].mxu0
      %v1163 = vpop.f32.mrb[0].mxu0
      %v1164 = vpop.f32.mrb[0].mxu0
      %1165 = vdwg.mxu0
      %1166 = vmatprep.subr.bf16.mxu0 0
      %1167 = vmatpush1.bf16.msra.mxu0 %v1096
      %1168 = vmatprep.subr.bf16.mxu0 0
      %1169 = vmatpush1.bf16.msra.mxu0 %v1097
      %1170 = vmatprep.subr.bf16.mxu0 0
      %1171 = vmatpush1.bf16.msra.mxu0 %v1098
      %1172 = vmatprep.subr.bf16.mxu0 0
      %1173 = vmatpush1.bf16.msra.mxu0 %v1099
      %1174 = vmatprep.subr.bf16.mxu0 0
      %1175 = vmatpush1.bf16.msra.mxu0 %v1100
      %1176 = vmatprep.subr.bf16.mxu0 0
      %1177 = vmatpush1.bf16.msra.mxu0 %v1101
      %1178 = vmatprep.subr.bf16.mxu0 0
      %1179 = vmatpush1.bf16.msra.mxu0 %v1102
      %1180 = vmatprep.subr.bf16.mxu0 0
      %1181 = vmatpush1.bf16.msra.mxu0 %v1103
      %1182 = vmatprep.subr.bf16.mxu0 0
      %1183 = vmatpush1.bf16.msra.mxu0 %v1104
      %1184 = vmatprep.subr.bf16.mxu0 0
      %1185 = vmatpush1.bf16.msra.mxu0 %v1105
      %1186 = vmatprep.subr.bf16.mxu0 0
      %1187 = vmatpush1.bf16.msra.mxu0 %v1106
      %1188 = vmatprep.subr.bf16.mxu0 0
      %1189 = vmatpush1.bf16.msra.mxu0 %v1107
      %1190 = vmatprep.subr.bf16.mxu0 0
      %1191 = vmatpush1.bf16.msra.mxu0 %v1108
      %1192 = vmatprep.subr.bf16.mxu0 0
      %1193 = vmatpush1.bf16.msra.mxu0 %v1109
      %1194 = vmatprep.subr.bf16.mxu0 0
      %1195 = vmatpush1.bf16.msra.mxu0 %v1110
      %1196 = vmatprep.subr.bf16.mxu0 0
      %1197 = vmatpush1.bf16.msra.mxu0 %v1111
      %1198 = vmatprep.mubr.bf16.mxu0 %v1121
      %1199 = vmatmul.mubr.bf16.gmra.mrb[0].mxu0 %v1120
      %v1200 = vpop.f32.mrb[0].mxu0
      %v1201 = vadd.f32 %v1161, %v1200
      %v1202 = vpop.f32.mrb[0].mxu0
      %v1203 = vpop.f32.mrb[0].mxu0
      %v1204 = vpop.f32.mrb[0].mxu0
      %1205 = vdwg.mxu0
      %v1206 = vadd.f32 %v1013, %v1201
      %1207 = vst [vmem:[#allocation2] sm:$0xff] %v1206
      %v1208 = vld [vmem:[#allocation3] sm:$0xff]
      %v1209 = vld [vmem:[%s602] sm:$0xff]
      %v1210 = vld [vmem:[%s602 + $0x8] sm:$0xff]
      %v1211 = vpack.c.bf16 %v886, %v885
      %v1212 = vpack.c.bf16 %v888, %v887
      %v1213 = vpack.c.bf16 %v890, %v889
      %v1214 = vpack.c.bf16 %v892, %v891
      %v1215 = vpack.c.bf16 %v894, %v893
      %v1216 = vpack.c.bf16 %v896, %v895
      %v1217 = vpack.c.bf16 %v898, %v897
      %v1218 = vpack.c.bf16 %v900, %v899
      %v1219 = vpack.c.bf16 %v902, %v901
      %v1220 = vpack.c.bf16 %v904, %v903
      %v1221 = vpack.c.bf16 %v906, %v905
      %v1222 = vpack.c.bf16 %v908, %v907
      %v1223 = vpack.c.bf16 %v910, %v909
      %v1224 = vpack.c.bf16 %v912, %v911
      %v1225 = vpack.c.bf16 %v914, %v913
      %v1226 = vpack.c.bf16 %v916, %v915
      %v1227 = vpack.c.bf16 %v918, %v917
      %v1228 = vpack.c.bf16 %v920, %v919
      %v1229 = vpack.c.bf16 %v922, %v921
      %v1230 = vpack.c.bf16 %v924, %v923
      %v1231 = vpack.c.bf16 %v926, %v925
      %v1232 = vpack.c.bf16 %v928, %v927
      %v1233 = vpack.c.bf16 %v930, %v929
      %v1234 = vpack.c.bf16 %v932, %v931
      %v1235 = vpack.c.bf16 %v934, %v933
      %v1236 = vpack.c.bf16 %v936, %v935
      %v1237 = vpack.c.bf16 %v938, %v937
      %v1238 = vpack.c.bf16 %v940, %v939
      %v1239 = vpack.c.bf16 %v942, %v941
      %v1240 = vpack.c.bf16 %v944, %v943
      %v1241 = vpack.c.bf16 %v946, %v945
      %v1242 = vpack.c.bf16 %v948, %v947
      %v1245 = vunpack.c.l.b16 %v1209
      %v1246 = vunpack.c.h.b16 %v1209
      %v1247 = vunpack.c.l.b16 %v1210
      %v1248 = vunpack.c.h.b16 %v1210
      %v1249 = vpack.c.b16 %v1245, %v1245
      %v1250 = vpack.c.b16 %v1246, %v1246
      %v1251 = vpack.c.b16 %v1247, %v1247
      %v1252 = vpack.c.b16 %v1248, %v1248
      %1257 = vmatprep.subr.bf16.mxu0 0
      %1258 = vmatpush1.bf16.msra.mxu0 %v1211
      %1259 = vmatprep.subr.bf16.mxu0 0
      %1260 = vmatpush1.bf16.msra.mxu0 %v1212
      %1261 = vmatprep.subr.bf16.mxu0 0
      %1262 = vmatpush1.bf16.msra.mxu0 %v1213
      %1263 = vmatprep.subr.bf16.mxu0 0
      %1264 = vmatpush1.bf16.msra.mxu0 %v1214
      %1265 = vmatprep.subr.bf16.mxu0 0
      %1266 = vmatpush1.bf16.msra.mxu0 %v1215
      %1267 = vmatprep.subr.bf16.mxu0 0
      %1268 = vmatpush1.bf16.msra.mxu0 %v1216
      %1269 = vmatprep.subr.bf16.mxu0 0
      %1270 = vmatpush1.bf16.msra.mxu0 %v1217
      %1271 = vmatprep.subr.bf16.mxu0 0
      %1272 = vmatpush1.bf16.msra.mxu0 %v1218
      %1273 = vmatprep.subr.bf16.mxu0 0
      %1274 = vmatpush1.bf16.msra.mxu0 %v1219
      %1275 = vmatprep.subr.bf16.mxu0 0
      %1276 = vmatpush1.bf16.msra.mxu0 %v1220
      %1277 = vmatprep.subr.bf16.mxu0 0
      %1278 = vmatpush1.bf16.msra.mxu0 %v1221
      %1279 = vmatprep.subr.bf16.mxu0 0
      %1280 = vmatpush1.bf16.msra.mxu0 %v1222
      %1281 = vmatprep.subr.bf16.mxu0 0
      %1282 = vmatpush1.bf16.msra.mxu0 %v1223
      %1283 = vmatprep.subr.bf16.mxu0 0
      %1284 = vmatpush1.bf16.msra.mxu0 %v1224
      %1285 = vmatprep.subr.bf16.mxu0 0
      %1286 = vmatpush1.bf16.msra.mxu0 %v1225
      %1287 = vmatprep.subr.bf16.mxu0 0
      %1288 = vmatpush1.bf16.msra.mxu0 %v1226
      %1289 = vmatprep.mubr.bf16.mxu0 %v1250
      %1290 = vmatmul.mubr.bf16.gmra.mrb[0].mxu0 %v1249
      %v1291 = vpop.f32.mrb[0].mxu0
      %v1292 = vadd.f32 0.0, %v1291
      %v1293 = vpop.f32.mrb[0].mxu0
      %v1294 = vpop.f32.mrb[0].mxu0
      %v1295 = vpop.f32.mrb[0].mxu0
      %1296 = vdwg.mxu0
      %1297 = vmatprep.subr.bf16.mxu0 0
      %1298 = vmatpush1.bf16.msra.mxu0 %v1227
      %1299 = vmatprep.subr.bf16.mxu0 0
      %1300 = vmatpush1.bf16.msra.mxu0 %v1228
      %1301 = vmatprep.subr.bf16.mxu0 0
      %1302 = vmatpush1.bf16.msra.mxu0 %v1229
      %1303 = vmatprep.subr.bf16.mxu0 0
      %1304 = vmatpush1.bf16.msra.mxu0 %v1230
      %1305 = vmatprep.subr.bf16.mxu0 0
      %1306 = vmatpush1.bf16.msra.mxu0 %v1231
      %1307 = vmatprep.subr.bf16.mxu0 0
      %1308 = vmatpush1.bf16.msra.mxu0 %v1232
      %1309 = vmatprep.subr.bf16.mxu0 0
      %1310 = vmatpush1.bf16.msra.mxu0 %v1233
      %1311 = vmatprep.subr.bf16.mxu0 0
      %1312 = vmatpush1.bf16.msra.mxu0 %v1234
      %1313 = vmatprep.subr.bf16.mxu0 0
      %1314 = vmatpush1.bf16.msra.mxu0 %v1235
      %1315 = vmatprep.subr.bf16.mxu0 0
      %1316 = vmatpush1.bf16.msra.mxu0 %v1236
      %1317 = vmatprep.subr.bf16.mxu0 0
      %1318 = vmatpush1.bf16.msra.mxu0 %v1237
      %1319 = vmatprep.subr.bf16.mxu0 0
      %1320 = vmatpush1.bf16.msra.mxu0 %v1238
      %1321 = vmatprep.subr.bf16.mxu0 0
      %1322 = vmatpush1.bf16.msra.mxu0 %v1239
      %1323 = vmatprep.subr.bf16.mxu0 0
      %1324 = vmatpush1.bf16.msra.mxu0 %v1240
      %1325 = vmatprep.subr.bf16.mxu0 0
      %1326 = vmatpush1.bf16.msra.mxu0 %v1241
      %1327 = vmatprep.subr.bf16.mxu0 0
      %1328 = vmatpush1.bf16.msra.mxu0 %v1242
      %1329 = vmatprep.mubr.bf16.mxu0 %v1252
      %1330 = vmatmul.mubr.bf16.gmra.mrb[0].mxu0 %v1251
      %v1331 = vpop.f32.mrb[0].mxu0
      %v1332 = vadd.f32 %v1292, %v1331
      %v1333 = vpop.f32.mrb[0].mxu0
      %v1334 = vpop.f32.mrb[0].mxu0
      %v1335 = vpop.f32.mrb[0].mxu0
      %1336 = vdwg.mxu0
      %v1337 = vadd.f32 %v1208, %v1332
      %1338 = vst [vmem:[#allocation3] sm:$0xff] %v1337
      %p1339 = scmp.eq.s32.totalorder %s30, 1
      // Predicated region
      $region65: #{adamoco_forward.2} parent=59 // pred_check
        %p1340 = pneg %p1339
      $region66: #{adamoco_forward.2} parent=59 // pred_check_branch
        %1342 = sbr.rel (%p1340) target = $region68
      $region67: #{adamoco_forward.2} parent=59 // pred_region
        %v1343 = vld [vmem:[%s7] sm:$0x1]
        %v1344 = vmul.f32 %v1343, 0.999
        %v1345 = vld [vmem:[%s3] sm:$0x1]
        %v1346 = vmul.f32 %v1345, 0.001
        %v1347 = vadd.f32 %v1344, %v1346
        %v1348 = vld [vmem:[%s8] sm:$0xff]
        %v1349 = vld [vmem:[%s8 + $0x8] sm:$0xff]
        %v1350 = vld [vmem:[%s8 + $0x10] sm:$0xff]
        %v1351 = vld [vmem:[%s8 + $0x18] sm:$0xff]
        %v1352 = vld [vmem:[%s8 + $0x20] sm:$0xff]
        %v1353 = vld [vmem:[%s8 + $0x28] sm:$0xff]
        %v1354 = vld [vmem:[%s8 + $0x30] sm:$0xff]
        %v1355 = vld [vmem:[%s8 + $0x38] sm:$0xff]
        %v1356 = vld [vmem:[%s8 + $0x40] sm:$0xff]
        %v1357 = vld [vmem:[%s8 + $0x48] sm:$0xff]
        %v1358 = vld [vmem:[%s8 + $0x50] sm:$0xff]
        %v1359 = vld [vmem:[%s8 + $0x58] sm:$0xff]
        %v1360 = vld [vmem:[%s8 + $0x60] sm:$0xff]
        %v1361 = vld [vmem:[%s8 + $0x68] sm:$0xff]
        %v1362 = vld [vmem:[%s8 + $0x70] sm:$0xff]
        %v1363 = vld [vmem:[%s8 + $0x78] sm:$0xff]
        %v1364 = vmul.f32 %v1348, 0.999
        %v1365 = vmul.f32 %v1349, 0.999
        %v1366 = vmul.f32 %v1350, 0.999
        %v1367 = vmul.f32 %v1351, 0.999
        %v1368 = vmul.f32 %v1352, 0.999
        %v1369 = vmul.f32 %v1353, 0.999
        %v1370 = vmul.f32 %v1354, 0.999
        %v1371 = vmul.f32 %v1355, 0.999
        %v1372 = vmul.f32 %v1356, 0.999
        %v1373 = vmul.f32 %v1357, 0.999
        %v1374 = vmul.f32 %v1358, 0.999
        %v1375 = vmul.f32 %v1359, 0.999
        %v1376 = vmul.f32 %v1360, 0.999
        %v1377 = vmul.f32 %v1361, 0.999
        %v1378 = vmul.f32 %v1362, 0.999
        %v1379 = vmul.f32 %v1363, 0.999
        %v1380 = vld [vmem:[%s4] sm:$0xff]
        %v1381 = vld [vmem:[%s4 + $0x8] sm:$0xff]
        %v1382 = vld [vmem:[%s4 + $0x10] sm:$0xff]
        %v1383 = vld [vmem:[%s4 + $0x18] sm:$0xff]
        %v1384 = vld [vmem:[%s4 + $0x20] sm:$0xff]
        %v1385 = vld [vmem:[%s4 + $0x28] sm:$0xff]
        %v1386 = vld [vmem:[%s4 + $0x30] sm:$0xff]
        %v1387 = vld [vmem:[%s4 + $0x38] sm:$0xff]
        %v1388 = vld [vmem:[%s4 + $0x40] sm:$0xff]
        %v1389 = vld [vmem:[%s4 + $0x48] sm:$0xff]
        %v1390 = vld [vmem:[%s4 + $0x50] sm:$0xff]
        %v1391 = vld [vmem:[%s4 + $0x58] sm:$0xff]
        %v1392 = vld [vmem:[%s4 + $0x60] sm:$0xff]
        %v1393 = vld [vmem:[%s4 + $0x68] sm:$0xff]
        %v1394 = vld [vmem:[%s4 + $0x70] sm:$0xff]
        %v1395 = vld [vmem:[%s4 + $0x78] sm:$0xff]
        %v1396 = vmul.f32 %v1380, 0.001
        %v1397 = vmul.f32 %v1381, 0.001
        %v1398 = vmul.f32 %v1382, 0.001
        %v1399 = vmul.f32 %v1383, 0.001
        %v1400 = vmul.f32 %v1384, 0.001
        %v1401 = vmul.f32 %v1385, 0.001
        %v1402 = vmul.f32 %v1386, 0.001
        %v1403 = vmul.f32 %v1387, 0.001
        %v1404 = vmul.f32 %v1388, 0.001
        %v1405 = vmul.f32 %v1389, 0.001
        %v1406 = vmul.f32 %v1390, 0.001
        %v1407 = vmul.f32 %v1391, 0.001
        %v1408 = vmul.f32 %v1392, 0.001
        %v1409 = vmul.f32 %v1393, 0.001
        %v1410 = vmul.f32 %v1394, 0.001
        %v1411 = vmul.f32 %v1395, 0.001
        %v1412 = vadd.f32 %v1364, %v1396
        %v1413 = vadd.f32 %v1365, %v1397
        %v1414 = vadd.f32 %v1366, %v1398
        %v1415 = vadd.f32 %v1367, %v1399
        %v1416 = vadd.f32 %v1368, %v1400
        %v1417 = vadd.f32 %v1369, %v1401
        %v1418 = vadd.f32 %v1370, %v1402
        %v1419 = vadd.f32 %v1371, %v1403
        %v1420 = vadd.f32 %v1372, %v1404
        %v1421 = vadd.f32 %v1373, %v1405
        %v1422 = vadd.f32 %v1374, %v1406
        %v1423 = vadd.f32 %v1375, %v1407
        %v1424 = vadd.f32 %v1376, %v1408
        %v1425 = vadd.f32 %v1377, %v1409
        %v1426 = vadd.f32 %v1378, %v1410
        %v1427 = vadd.f32 %v1379, %v1411
        %v1428 = vld [vmem:[%s9] sm:$0x1]
        %v1429 = vmul.f32 %v1428, 0.999
        %v1430 = vld [vmem:[%s5] sm:$0x1]
        %v1431 = vmul.f32 %v1430, 0.001
        %v1432 = vadd.f32 %v1429, %v1431
        %1433 = vst [vmem:[%s16] sm:$0x1] %v1347
        %1434 = vst [vmem:[%s17] sm:$0xff] %v1412
        %1435 = vst [vmem:[%s17 + $0x8] sm:$0xff] %v1413
        %1436 = vst [vmem:[%s17 + $0x10] sm:$0xff] %v1414
        %1437 = vst [vmem:[%s17 + $0x18] sm:$0xff] %v1415
        %1438 = vst [vmem:[%s17 + $0x20] sm:$0xff] %v1416
        %1439 = vst [vmem:[%s17 + $0x28] sm:$0xff] %v1417
        %1440 = vst [vmem:[%s17 + $0x30] sm:$0xff] %v1418
        %1441 = vst [vmem:[%s17 + $0x38] sm:$0xff] %v1419
        %1442 = vst [vmem:[%s17 + $0x40] sm:$0xff] %v1420
        %1443 = vst [vmem:[%s17 + $0x48] sm:$0xff] %v1421
        %1444 = vst [vmem:[%s17 + $0x50] sm:$0xff] %v1422
        %1445 = vst [vmem:[%s17 + $0x58] sm:$0xff] %v1423
        %1446 = vst [vmem:[%s17 + $0x60] sm:$0xff] %v1424
        %1447 = vst [vmem:[%s17 + $0x68] sm:$0xff] %v1425
        %1448 = vst [vmem:[%s17 + $0x70] sm:$0xff] %v1426
        %1449 = vst [vmem:[%s17 + $0x78] sm:$0xff] %v1427
        %1450 = vst [vmem:[%s18] sm:$0x1] %v1432
        %v1451 = vld [vmem:[#allocation2] sm:$0xff]
        %v1452 = vld [vmem:[%s3] sm:$0x1]
        %v1454 = vlaneseq
        %v1455 = vshrl.u32 %v1454, 7
        %v1456 = vsub.s32 0, %v1455
        %v1457 = vrot.slane %v1452, %v1456
        %v1459 = vadd.f32 %v1451, %v1457
        %v1460 = vld [vmem:[#allocation3] sm:$0xff]
        %v1462 = vlaneseq
        %v1463 = vshrl.u32 %v1462, 7
        %v1464 = vsub.s32 0, %v1463
        %v1465 = vrot.slane %v1347, %v1464
        %v1467 = vadd.f32 %v1460, %v1465
        %1468 = vst [vmem:[%s10] sm:$0xff] %v1459
        %v1469 = vld [vmem:[%s4] sm:$0xff]
        %v1470 = vld [vmem:[%s4 + $0x8] sm:$0xff]
        %v1471 = vld [vmem:[%s4 + $0x10] sm:$0xff]
        %v1472 = vld [vmem:[%s4 + $0x18] sm:$0xff]
        %v1473 = vld [vmem:[%s4 + $0x20] sm:$0xff]
        %v1474 = vld [vmem:[%s4 + $0x28] sm:$0xff]
        %v1475 = vld [vmem:[%s4 + $0x30] sm:$0xff]
        %v1476 = vld [vmem:[%s4 + $0x38] sm:$0xff]
        %v1477 = vld [vmem:[%s4 + $0x40] sm:$0xff]
        %v1478 = vld [vmem:[%s4 + $0x48] sm:$0xff]
        %v1479 = vld [vmem:[%s4 + $0x50] sm:$0xff]
        %v1480 = vld [vmem:[%s4 + $0x58] sm:$0xff]
        %v1481 = vld [vmem:[%s4 + $0x60] sm:$0xff]
        %v1482 = vld [vmem:[%s4 + $0x68] sm:$0xff]
        %v1483 = vld [vmem:[%s4 + $0x70] sm:$0xff]
        %v1484 = vld [vmem:[%s4 + $0x78] sm:$0xff]
        %v1485 = vld [vmem:[%s5] sm:$0x1]
        %v1487 = vlaneseq
        %v1488 = vshrl.u32 %v1487, 7
        %v1489 = vsub.s32 0, %v1488
        %v1490 = vrot.slane %v1485, %v1489
        %1492 = vmatprep.subr.mxu0 0.0
        %1493 = vmatpush1.msra.mxu0 %v1469
        %1494 = vmatprep.subr.mxu0 0.0
        %1495 = vmatpush1.msra.mxu0 %v1470
        %1496 = vmatprep.subr.mxu0 0.0
        %1497 = vmatpush1.msra.mxu0 %v1471
        %1498 = vmatprep.subr.mxu0 0.0
        %1499 = vmatpush1.msra.mxu0 %v1472
        %1500 = vmatprep.subr.mxu0 0.0
        %1501 = vmatpush1.msra.mxu0 %v1473
        %1502 = vmatprep.subr.mxu0 0.0
        %1503 = vmatpush1.msra.mxu0 %v1474
        %1504 = vmatprep.subr.mxu0 0.0
        %1505 = vmatpush1.msra.mxu0 %v1475
        %1506 = vmatprep.subr.mxu0 0.0
        %1507 = vmatpush1.msra.mxu0 %v1476
        %1508 = vmatprep.subr.mxu0 0.0
        %1509 = vmatpush1.msra.mxu0 %v1477
        %1510 = vmatprep.subr.mxu0 0.0
        %1511 = vmatpush1.msra.mxu0 %v1478
        %1512 = vmatprep.subr.mxu0 0.0
        %1513 = vmatpush1.msra.mxu0 %v1479
        %1514 = vmatprep.subr.mxu0 0.0
        %1515 = vmatpush1.msra.mxu0 %v1480
        %1516 = vmatprep.subr.mxu0 0.0
        %1517 = vmatpush1.msra.mxu0 %v1481
        %1518 = vmatprep.subr.mxu0 0.0
        %1519 = vmatpush1.msra.mxu0 %v1482
        %1520 = vmatprep.subr.mxu0 0.0
        %1521 = vmatpush1.msra.mxu0 %v1483
        %1522 = vmatprep.subr.mxu0 0.0
        %1523 = vmatpush1.msra.mxu0 %v1484
        %1524 = vmatprep.subr.mxu0 0.0
        %1525 = vmatpush1.msra.mxu0 0.0
        %1526 = vmatprep.subr.mxu0 0.0
        %1527 = vmatpush1.msra.mxu0 0.0
        %1528 = vmatprep.subr.mxu0 0.0
        %1529 = vmatpush1.msra.mxu0 0.0
        %1530 = vmatprep.subr.mxu0 0.0
        %1531 = vmatpush1.msra.mxu0 0.0
        %1532 = vmatprep.subr.mxu0 0.0
        %1533 = vmatpush1.msra.mxu0 0.0
        %1534 = vmatprep.subr.mxu0 0.0
        %1535 = vmatpush1.msra.mxu0 0.0
        %1536 = vmatprep.subr.mxu0 0.0
        %1537 = vmatpush1.msra.mxu0 0.0
        %1538 = vmatprep.subr.mxu0 0.0
        %1539 = vmatpush1.msra.mxu0 0.0
        %1540 = vmatprep.subr.mxu0 0.0
        %1541 = vmatpush1.msra.mxu0 0.0
        %1542 = vmatprep.subr.mxu0 0.0
        %1543 = vmatpush1.msra.mxu0 0.0
        %1544 = vmatprep.subr.mxu0 0.0
        %1545 = vmatpush1.msra.mxu0 0.0
        %1546 = vmatprep.subr.mxu0 0.0
        %1547 = vmatpush1.msra.mxu0 0.0
        %1548 = vmatprep.subr.mxu0 0.0
        %1549 = vmatpush1.msra.mxu0 0.0
        %1550 = vmatprep.subr.mxu0 0.0
        %1551 = vmatpush1.msra.mxu0 0.0
        %1552 = vmatprep.subr.mxu0 0.0
        %1553 = vmatpush1.msra.mxu0 0.0
        %1554 = vmatprep.subr.mxu0 0.0
        %1555 = vmatpush1.msra.mxu0 0.0
        %1556 = vmatprep.mubr.f32.mxu0 0.0
        %1557 = vmatmul.mubr.f32.gmra.mrb[0].mxu0 %v1459
        %v1558 = vpop.f32.mrb[0].mxu0
        %v1559 = vadd.f32 %v1490, %v1558
        %v1560 = vpop.f32.mrb[0].mxu0
        %1561 = vdwg.mxu0
        %1562 = vst [vmem:[%s11] sm:$0xff] %v1559
        %v1563 = vmul.f32 %v1459, %v1459
        %1564 = vadd.xlane.f32.xlu0 %v1563
        %v1565 = vpop.xlane.xlu0 %1564
        %v1566 = vmax.f32 %v1565, 1e-24
        %v1567 = vrsqrt.pop %v1566
        %v1568 = vmul.f32 %v1459, %v1567
        %v1569 = vmul.f32 %v1467, %v1467
        %1570 = vadd.xlane.f32.xlu0 %v1569
        %v1571 = vpop.xlane.xlu0 %1570
        %v1572 = vmax.f32 %v1571, 1e-24
        %v1573 = vrsqrt.pop %v1572
        %v1574 = vmul.f32 %v1467, %v1573
        %1575 = vst [vmem:[%s12] sm:$0xff] %v1574
        %v1576 = vpack.c.bf16 %v1568, %v1568
        %1577 = vst [vmem:[%s13] sm:$0xf] %v1576
        %v1578 = vmul.f32 %v1568, %v1574
        %1579 = vadd.xlane.f32.xlu0 %v1578
        %v1580 = vpop.xlane.xlu0 %1579
        %v1581 = vmul.f32 %v1580, 14.285714
        %vm1582 = vcmask 7168
        %1583 = vst.msk [vmem:[%s14] sm:$0xff] %vm1582, %v1581
      $region68: #{adamoco_forward.2} parent=59 // pred_fallthru
        _
      %s1584 = smul.u32 64, %s30
      %p1585 = scmp.lt.s32.totalorder %s1584, 127
      %s1586 = scalar_select %p1585, %s1584, 127
      %s1587 = smul.addr %s1586, 8
      %s1588 = scalar_lea.vmem %s15, %s1587
      // Predicated region
      $region69: #{adamoco_forward.2} parent=59 // pred_check
        %p1589 = pneg %p273
      $region70: #{adamoco_forward.2} parent=59 // pred_check_branch
        %1591 = sbr.rel (%p1589) target = $region72
      $region71: #{adamoco_forward.2} parent=59 // pred_region
        _
      $region72: #{adamoco_forward.2} parent=59 // pred_fallthru
        _
      // Predicated region
      $region73: #{adamoco_forward.2} parent=59 // pred_check
        %p1592 = pneg %p294
      $region74: #{adamoco_forward.2} parent=59 // pred_check_branch
        %1594 = sbr.rel (%p1592) target = $region76
      $region75: #{adamoco_forward.2} parent=59 // pred_region
        _
      $region76: #{adamoco_forward.2} parent=59 // pred_fallthru
        _
      // Predicated region
      $region77: #{adamoco_forward.2} parent=59 // pred_check
        %p1595 = pneg %p315
      $region78: #{adamoco_forward.2} parent=59 // pred_check_branch
        %1597 = sbr.rel (%p1595) target = $region80
      $region79: #{adamoco_forward.2} parent=59 // pred_region
        _
      $region80: #{adamoco_forward.2} parent=59 // pred_fallthru
        _
      // Predicated region
      $region81: #{adamoco_forward.2} parent=59 // pred_check
        %p1598 = pneg %p336
      $region82: #{adamoco_forward.2} parent=59 // pred_check_branch
        %1600 = sbr.rel (%p1598) target = $region84
      $region83: #{adamoco_forward.2} parent=59 // pred_region
        _
      $region84: #{adamoco_forward.2} parent=59 // pred_fallthru
        _
      // Predicated region
      $region85: #{adamoco_forward.2} parent=59 // pred_check
        %p1601 = pneg %p357
      $region86: #{adamoco_forward.2} parent=59 // pred_check_branch
        %1603 = sbr.rel (%p1601) target = $region88
      $region87: #{adamoco_forward.2} parent=59 // pred_region
        _
      $region88: #{adamoco_forward.2} parent=59 // pred_fallthru
        _
      // Predicated region
      $region89: #{adamoco_forward.2} parent=59 // pred_check
        %p1604 = pneg %p383
      $region90: #{adamoco_forward.2} parent=59 // pred_check_branch
        %1606 = sbr.rel (%p1604) target = $region92
      $region91: #{adamoco_forward.2} parent=59 // pred_region
        %s1607 = smul.u32 64, %s30
      $region92: #{adamoco_forward.2} parent=59 // pred_fallthru
        _
      // Predicated region
      $region93: #{adamoco_forward.2} parent=59 // pred_check
        %p1608 = pneg %p404
      $region94: #{adamoco_forward.2} parent=59 // pred_check_branch
        %1610 = sbr.rel (%p1608) target = $region96
      $region95: #{adamoco_forward.2} parent=59 // pred_region
        _
      $region96: #{adamoco_forward.2} parent=59 // pred_fallthru
        _
      // Predicated region
      $region97: #{adamoco_forward.2} parent=59 // pred_check
        %p1611 = pneg %p425
      $region98: #{adamoco_forward.2} parent=59 // pred_check_branch
        %1613 = sbr.rel (%p1611) target = $region100
      $region99: #{adamoco_forward.2} parent=59 // pred_region
        _
      $region100: #{adamoco_forward.2} parent=59 // pred_fallthru
        _
      // Predicated region
      $region101: #{adamoco_forward.2} parent=59 // pred_check
        %p1614 = pneg %p446
      $region102: #{adamoco_forward.2} parent=59 // pred_check_branch
        %1616 = sbr.rel (%p1614) target = $region104
      $region103: #{adamoco_forward.2} parent=59 // pred_region
        _
      $region104: #{adamoco_forward.2} parent=59 // pred_fallthru
        _
      // Predicated region
      $region105: #{adamoco_forward.2} parent=59 // pred_check
        %p1617 = pneg %p273
      $region106: #{adamoco_forward.2} parent=59 // pred_check_branch
        %1619 = sbr.rel (%p1617) target = $region108
      $region107: #{adamoco_forward.2} parent=59 // pred_region
        _
      $region108: #{adamoco_forward.2} parent=59 // pred_fallthru
        _
      // Predicated region
      $region109: #{adamoco_forward.2} parent=59 // pred_check
        %p1620 = pneg %p294
      $region110: #{adamoco_forward.2} parent=59 // pred_check_branch
        %1622 = sbr.rel (%p1620) target = $region112
      $region111: #{adamoco_forward.2} parent=59 // pred_region
        _
      $region112: #{adamoco_forward.2} parent=59 // pred_fallthru
        _
      // Predicated region
      $region113: #{adamoco_forward.2} parent=59 // pred_check
        %p1623 = pneg %p315
      $region114: #{adamoco_forward.2} parent=59 // pred_check_branch
        %1625 = sbr.rel (%p1623) target = $region116
      $region115: #{adamoco_forward.2} parent=59 // pred_region
        _
      $region116: #{adamoco_forward.2} parent=59 // pred_fallthru
        _
      // Predicated region
      $region117: #{adamoco_forward.2} parent=59 // pred_check
        %p1626 = pneg %p336
      $region118: #{adamoco_forward.2} parent=59 // pred_check_branch
        %1628 = sbr.rel (%p1626) target = $region120
      $region119: #{adamoco_forward.2} parent=59 // pred_region
        _
      $region120: #{adamoco_forward.2} parent=59 // pred_fallthru
        _
      // Predicated region
      $region121: #{adamoco_forward.2} parent=59 // pred_check
        %p1629 = pneg %p357
      $region122: #{adamoco_forward.2} parent=59 // pred_check_branch
        %1631 = sbr.rel (%p1629) target = $region124
      $region123: #{adamoco_forward.2} parent=59 // pred_region
        _
      $region124: #{adamoco_forward.2} parent=59 // pred_fallthru
        _
      // Predicated region
      $region125: #{adamoco_forward.2} parent=59 // pred_check
        %p1632 = pneg %p404
      $region126: #{adamoco_forward.2} parent=59 // pred_check_branch
        %1634 = sbr.rel (%p1632) target = $region128
      $region127: #{adamoco_forward.2} parent=59 // pred_region
        _
      $region128: #{adamoco_forward.2} parent=59 // pred_fallthru
        _
      // Predicated region
      $region129: #{adamoco_forward.2} parent=59 // pred_check
        %p1635 = pneg %p425
      $region130: #{adamoco_forward.2} parent=59 // pred_check_branch
        %1637 = sbr.rel (%p1635) target = $region132
      $region131: #{adamoco_forward.2} parent=59 // pred_region
        _
      $region132: #{adamoco_forward.2} parent=59 // pred_fallthru
        _
      // Predicated region
      $region133: #{adamoco_forward.2} parent=59 // pred_check
        %p1638 = pneg %p446
      $region134: #{adamoco_forward.2} parent=59 // pred_check_branch
        %1640 = sbr.rel (%p1638) target = $region136
      $region135: #{adamoco_forward.2} parent=59 // pred_region
        _
      $region136: #{adamoco_forward.2} parent=59 // pred_fallthru
        _
    $region60: #{adamoco_forward.2} parent=5 // pred_fallthru
      _
    %p1641 = scmp.le.s32.totalorder 2, %s25
    // Predicated region
    $region137: #{adamoco_forward.2} parent=5 // pred_check
      %p1642 = pneg %p1641
    $region138: #{adamoco_forward.2} parent=5 // pred_check_branch
      %1644 = sbr.rel (%p1642) target = $region140
    $region139: #{adamoco_forward.2} parent=5 // pred_region
      %s1645 = ssub.s32 %s25, 2
      // Predicated region
      $region141: #{adamoco_forward.2} parent=139 // pred_check
        %p1646 = pneg %p389
      $region142: #{adamoco_forward.2} parent=139 // pred_check_branch
        %1648 = sbr.rel (%p1646) target = $region144
      $region143: #{adamoco_forward.2} parent=139 // pred_region
        %s1649 = smul.u32 64, %s31
        %p1650 = scmp.lt.s32.totalorder %s1649, 127
        %s1651 = scalar_select %p1650, %s1649, 127
        %s1652 = smul.addr %s1651, 8
        %s1653 = scalar_lea.vmem %s15, %s1652
      $region144: #{adamoco_forward.2} parent=139 // pred_fallthru
        _
    $region140: #{adamoco_forward.2} parent=5 // pred_fallthru
      _
  $region6: #{adamoco_forward.2} parent=0 // loop_footer
    %s29 = sadd.s32 1, %s25
  $region7: #{adamoco_forward.2} parent=0 // loop_footer_branch
    %24 = sbr.rel target = $region3
  $region8: #{adamoco_forward.2} parent=0 // loop_exit
    _

</llo_original>
